<compile_context>
chip_gen: v7x
topology: tpu7x:2x2x1
jax: 0.10.0
libtpu: 0.0.40
codegen_flags: <defaults>
</compile_context>

<pallas_src>
import jax
import jax.numpy as jnp
from jax import lax
from jax.experimental import pallas as pl
from jax.experimental.pallas import tpu as pltpu


# ----------------------------------------------------------------------------
# helpers
# ----------------------------------------------------------------------------
def _round_up(x, m):
    return (x + m - 1) // m * m


def _pick_row_tile(h, max_rows):
    """Largest multiple-of-8 divisor of h that is <= max_rows (fallback: h)."""
    best = h
    t = 8
    while t <= min(h, max_rows):
        if h % t == 0:
            best = t
        t += 8
    return best


# ----------------------------------------------------------------------------
# Fused DA_Net kernel: conv3x3+ReLU -> conv3x3+ReLU -> conv1x1 (VPU)
# ----------------------------------------------------------------------------
def _fused_danet_kernel(x_ref, w1_ref, b1_ref, w2_ref, b2_ref, w3_ref, b3_ref,
                        o_ref, h1_buf):
    """Per grid step (n, t).

    Layouts:
      x_ref  : (Hp, Cin, Wp) bf16   full padded image of sample n (resident)
      w1_ref : (9, C1, Cin)  bf16   tap-major conv1 weights (k = dy*3+dx)
      b1_ref : (C1, 1)       f32
      w2_ref : (9, C2, C1)   bf16
      b2_ref : (C2, 1)       f32
      w3_ref : (C2, 1)       f32    1x1 conv weights (VPU channel sum)
      b3_ref : (1, 1)        f32
      o_ref  : (TH, W)       f32    density rows of tile t (lane-dense)
      h1_buf : (TH+2, C1, W+2) bf16 VMEM scratch: conv1 activations + 1-px halo
    """
    th, w = o_ref.shape
    c1 = b1_ref.shape[0]
    c2 = b2_ref.shape[0]
    w1 = w + 2                              # conv1 output width (halo for conv2)
    h_img = pl.num_programs(1) * th         # full (unpadded) image height

    r0 = pl.program_id(1) * th
    if th % 8 == 0:
        r0 = pl.multiple_of(r0, 8)

    # Hoist weight/bias loads out of the row loops (loop constants).
    w1_taps = [w1_ref[k] for k in range(9)]     # each (C1, Cin) bf16
    w2_taps = [w2_ref[k] for k in range(9)]     # each (C2, C1)  bf16
    b1 = b1_ref[...]
    b2 = b2_ref[...]
    w3 = w3_ref[...]
    b3 = b3_ref[...]

    # Column mask: columns 0 and W+1 of h1 are conv2's own zero padding.
    col = lax.broadcasted_iota(jnp.int32, (c1, w1), 1)
    col_ok = (col >= 1) & (col <= w)

    # --- conv1 (3x3, Cin->C1) + ReLU over tile rows + 1-row halo each side ---
    def conv1_row(y, carry):
        acc = jnp.zeros((c1, w1), jnp.float32)
        for dy in range(3):
            xrow = x_ref[r0 + y + dy]            # (Cin, Wp) bf16, dynamic row
            for dx in range(3):
                k = dy * 3 + dx
                acc += jnp.dot(w1_taps[k], xrow[:, dx:dx + w1],
                               preferred_element_type=jnp.float32)
        h = jnp.maximum(acc + b1, 0.0)
        # Positions outside the valid image must be conv2's ZERO padding
        # (PyTorch padding=1 semantics), not conv1-of-padded-zeros values.
        r_img = r0 + y                           # = image row + 1
        row_ok = (r_img >= 1) & (r_img <= h_img)
        h = jnp.where(col_ok & row_ok, h, 0.0)
        h1_buf[y] = h.astype(jnp.bfloat16)
        return carry

    lax.fori_loop(0, th + 2, conv1_row, 0)

    # --- conv2 (3x3, C1->C2)+ReLU, then 1x1 (C2->1) on the VPU, per row ------
    def conv2_row(yy, carry):
        acc = jnp.zeros((c2, w), jnp.float32)
        for dy in range(3):
            hrow = h1_buf[yy + dy]               # (C1, W+2) bf16
            for dx in range(3):
                k = dy * 3 + dx
                acc += jnp.dot(w2_taps[k], hrow[:, dx:dx + w],
                               preferred_element_type=jnp.float32)
        h2 = jnp.maximum(acc + b2, 0.0)          # (C2, W) f32
        # 1x1 conv as VPU weighted channel sum (no N=1 MXU matmul).
        dens = jnp.sum(h2 * w3, axis=0, keepdims=True) + b3   # (1, W)
        o_ref[pl.ds(yy, 1), :] = dens.astype(o_ref.dtype)
        return carry

    lax.fori_loop(0, th, conv2_row, 0)


def da_net_pallas(params, im_nchw, *, row_tile=64):
    """Fused 3-layer conv stack.  im_nchw: (N, Cin, H, W) -> (N, H, W) f32."""
    n, cin, h, w = im_nchw.shape
    c1 = params["b1"].shape[0]
    c2 = params["b2"].shape[0]

    th = _pick_row_tile(h, row_tile)
    n_tiles = h // th

    # (N, H, Cin, W) layout: channels on sublanes, width on lanes; zero-pad
    # rows/cols by 2 (two stacked 3x3 convs). bf16 halves HBM traffic & VMEM;
    # all matmuls accumulate in f32.
    x = jnp.transpose(im_nchw.astype(jnp.float32), (0, 2, 1, 3))
    x = jnp.pad(x, ((0, 0), (2, 2), (0, 0), (2, 2))).astype(jnp.bfloat16)
    hp, wp = h + 4, w + 4

    w1 = params["w1"].astype(jnp.bfloat16)                     # (9, C1, Cin)
    w2 = params["w2"].astype(jnp.bfloat16)                     # (9, C2, C1)
    b1 = params["b1"].reshape(c1, 1).astype(jnp.float32)
    b2 = params["b2"].reshape(c2, 1).astype(jnp.float32)
    w3 = params["w3"].reshape(c2, 1).astype(jnp.float32)
    b3 = params["b3"].reshape(1, 1).astype(jnp.float32)

    dens = pl.pallas_call(
        _fused_danet_kernel,
        out_shape=jax.ShapeDtypeStruct((n, h, w), jnp.float32),
        grid_spec=pltpu.PrefetchScalarGridSpec(
            num_scalar_prefetch=0,
            grid=(n, n_tiles),
            in_specs=[
                # Full padded image of sample b: resident across row-tile axis.
                pl.BlockSpec((None, hp, cin, wp), lambda b, t: (b, 0, 0, 0)),
                # Weights / biases: constant index maps -> loaded once.
                pl.BlockSpec((9, c1, cin), lambda b, t: (0, 0, 0)),
                pl.BlockSpec((c1, 1), lambda b, t: (0, 0)),
                pl.BlockSpec((9, c2, c1), lambda b, t: (0, 0, 0)),
                pl.BlockSpec((c2, 1), lambda b, t: (0, 0)),
                pl.BlockSpec((c2, 1), lambda b, t: (0, 0)),
                pl.BlockSpec((1, 1), lambda b, t: (0, 0)),
            ],
            out_specs=pl.BlockSpec((None, th, w), lambda b, t: (b, t, 0)),
            scratch_shapes=[pltpu.VMEM((th + 2, c1, w + 2), jnp.bfloat16)],
        ),
        compiler_params=pltpu.CompilerParams(
            dimension_semantics=("parallel", "parallel")),
    )(x, w1, b1, w2, b2, w3, b3)
    return dens


# ----------------------------------------------------------------------------
# Tiled MSE loss kernel (nn.MSELoss, reduction='mean')
# ----------------------------------------------------------------------------
def _mse_partial_kernel(p_ref, g_ref, o_ref):
    @pl.when(pl.program_id(0) == 0)
    def _():
        o_ref[...] = jnp.zeros_like(o_ref)

    d = p_ref[...] - g_ref[...]
    o_ref[...] += jnp.sum(d * d)


def pallas_mse(pred, gt, *, row_tile=256):
    assert pred.shape == gt.shape
    n_elem = pred.size
    lanes = 128
    p = pred.reshape(-1).astype(jnp.float32)
    g = gt.reshape(-1).astype(jnp.float32)
    rows = -(-n_elem // lanes)
    tr = min(row_tile, _round_up(rows, 8))
    rows_p = _round_up(rows, tr)
    pad = rows_p * lanes - n_elem
    if pad:
        p = jnp.pad(p, (0, pad))       # zero padding contributes 0 to the SSE
        g = jnp.pad(g, (0, pad))
    p2 = p.reshape(rows_p, lanes)
    g2 = g.reshape(rows_p, lanes)

    sse = pl.pallas_call(
        _mse_partial_kernel,
        out_shape=jax.ShapeDtypeStruct((1, 1), jnp.float32),
        grid_spec=pltpu.PrefetchScalarGridSpec(
            num_scalar_prefetch=0,
            grid=(rows_p // tr,),
            in_specs=[pl.BlockSpec((tr, lanes), lambda i: (i, 0)),
                      pl.BlockSpec((tr, lanes), lambda i: (i, 0))],
            out_specs=pl.BlockSpec((1, 1), lambda i: (0, 0)),
        ),
        compiler_params=pltpu.CompilerParams(
            dimension_semantics=("arbitrary",)),
    )(p2, g2)
    return sse[0, 0] / jnp.float32(n_elem)


# ----------------------------------------------------------------------------
# CrowdCounter forward
# ----------------------------------------------------------------------------
def init_params(key, c_in=4, c1=16, c2=8):
    k = jax.random.split(key, 6)
    s = 0.05
    # Conv weights are stored tap-major: (kh*kw, Cout, Cin), k = dy*3 + dx.
    # To import PyTorch Conv2d weights (Cout, Cin, kh, kw):
    #   w.transpose(2, 3, 0, 1).reshape(9, Cout, Cin)
    return {
        "w1": s * jax.random.normal(k[0], (9, c1, c_in), jnp.float32),
        "b1": s * jax.random.normal(k[1], (c1,), jnp.float32),
        "w2": s * jax.random.normal(k[2], (9, c2, c1), jnp.float32),
        "b2": s * jax.random.normal(k[3], (c2,), jnp.float32),
        "w3": s * jax.random.normal(k[4], (c2,), jnp.float32),
        "b3": s * jax.random.normal(k[5], (1,), jnp.float32),
    }


def crowd_counter_forward(params, im_data_nchw, gt_data_nchw, *, training=True,
                          row_tile=64):
    """Mirrors CrowdCounter.forward: returns (density_map NCHW, mse loss)."""
    dens = da_net_pallas(params, im_data_nchw, row_tile=row_tile)  # (N, H, W)
    final_nchw = dens[:, None, :, :]                               # (N, 1, H, W)
    if training:
        loss_mse = pallas_mse(final_nchw, gt_data_nchw.astype(jnp.float32))
        return final_nchw, loss_mse
    return final_nchw, None


# ----------------------------------------------------------------------------
# Pure-JAX reference (correctness check only)
# ----------------------------------------------------------------------------
def _ref_forward(params, im, gt):
    x = im.astype(jnp.float32)

    def conv(inp, w_taps, b, relu):
        o, i = w_taps.shape[1], w_taps.shape[2]
        w = jnp.transpose(w_taps.reshape(3, 3, o, i), (2, 3, 0, 1))  # OIHW
        y = lax.conv_general_dilated(inp, w, (1, 1), "SAME",
                                     dimension_numbers=("NCHW", "OIHW", "NCHW"))
        y = y + b.reshape(1, -1, 1, 1)
        return jnp.maximum(y, 0.0) if relu else y

    h = conv(x, params["w1"], params["b1"], True)
    h = conv(h, params["w2"], params["b2"], True)
    d = jnp.sum(h * params["w3"].reshape(1, -1, 1, 1), axis=1, keepdims=True)
    d = d + params["b3"].reshape(1, 1, 1, 1)
    loss = jnp.mean((d - gt.astype(jnp.float32)) ** 2)
    return d, loss


# ----------------------------------------------------------------------------
if __name__ == "__main__":
    key = jax.random.PRNGKey(0)
    k_im, k_gt, k_p = jax.random.split(key, 3)

    N, C, H, W = 2, 4, 16, 16
    im_data = jax.random.normal(k_im, (N, C, H, W), jnp.float32)       # NCHW
    gt_data = jax.random.uniform(k_gt, (N, 1, H, W), jnp.float32)      # NCHW GT

    params = init_params(k_p, c_in=C)

    fwd = jax.jit(lambda p, im, gt: crowd_counter_forward(
        p, im, gt, training=True, row_tile=8))
    final, loss = fwd(params, im_data, gt_data)
    final = jax.block_until_ready(final)
    loss = jax.block_until_ready(loss)

    assert final.shape == (N, 1, H, W)
    assert loss.shape == ()

    # Sanity check against a plain-JAX reference (bf16 MXU inputs -> loose tol).
    ref_final, ref_loss = _ref_forward(params, im_data, gt_data)
    max_err = float(jnp.max(jnp.abs(final - ref_final)))
    loss_err = float(jnp.abs(loss - ref_loss))
    assert max_err < 5e-3, f"density map mismatch: {max_err}"
    assert loss_err < 1e-2 * (1.0 + float(ref_loss)), f"loss mismatch: {loss_err}"

    print("KERNEL_OK")
</pallas_src>

<mosaic_0001>
module attributes {stable_mosaic.version = 11 : i64} {
  func.func @_mse_partial_kernel(%arg0: i32, %arg1: memref<8x128xf32, #tpu.memory_space<vmem>>, %arg2: memref<8x128xf32, #tpu.memory_space<vmem>>, %arg3: memref<1x1xf32, #tpu.memory_space<vmem>>) attributes {dimension_semantics = [#tpu.dimension_semantics<arbitrary>], iteration_bounds = array<i64: 1>, scalar_prefetch = 0 : i64, scratch_operands = 0 : i64, tpu.core_type = #tpu.core_type<tc>, window_params = [{transform_indices = @transform_0, window_bounds = array<i64: 8, 128>}, {transform_indices = @transform_1, window_bounds = array<i64: 8, 128>}, {pipeline_mode = #tpu.pipeline_mode<synchronous>, transform_indices = @transform_2, window_bounds = array<i64: 1, 1>}]} {
    %c0_i32 = arith.constant 0 : i32
    %0 = arith.cmpi eq, %arg0, %c0_i32 : i32
    %1 = arith.extui %0 : i1 to i32
    %c0_i32_0 = arith.constant 0 : i32
    %2 = arith.cmpi ne, %1, %c0_i32_0 : i32
    scf.if %2 {
      %cst_8 = arith.constant 0.000000e+00 : f32
      %15 = vector.broadcast %cst_8 : f32 to vector<1x1xf32>
      %c0_9 = arith.constant 0 : index
      %c0_10 = arith.constant 0 : index
      %16 = vector.load %arg3[%c0_9, %c0_10] : memref<1x1xf32, #tpu.memory_space<vmem>>, vector<1x1xf32>
      tpu.vector_store %arg3[%c0_9, %c0_10], %15 {strides = array<i32>} : memref<1x1xf32, #tpu.memory_space<vmem>>, vector<1x1xf32>,
    } else {
    }
    %c0 = arith.constant 0 : index
    %c0_1 = arith.constant 0 : index
    %3 = vector.load %arg1[%c0, %c0_1] : memref<8x128xf32, #tpu.memory_space<vmem>>, vector<8x128xf32>
    %c0_2 = arith.constant 0 : index
    %c0_3 = arith.constant 0 : index
    %4 = vector.load %arg2[%c0_2, %c0_3] : memref<8x128xf32, #tpu.memory_space<vmem>>, vector<8x128xf32>
    %5 = arith.subf %3, %4 : vector<8x128xf32>
    %c0_4 = arith.constant 0 : index
    %c0_5 = arith.constant 0 : index
    %6 = vector.load %arg3[%c0_4, %c0_5] : memref<1x1xf32, #tpu.memory_space<vmem>>, vector<1x1xf32>
    %7 = arith.mulf %5, %5 : vector<8x128xf32>
    %8 = vector.shape_cast %7 : vector<8x128xf32> to vector<1x8x128xf32>
    %cst = arith.constant dense<0.000000e+00> : vector<1xf32>
    %9 = vector.multi_reduction <add>, %8, %cst [1, 2] : vector<1x8x128xf32> to vector<1xf32>
    %10 = vector.shape_cast %9 : vector<1xf32> to vector<1x1x1xf32>
    %11 = vector.extract %10[0, 0, 0] : f32 from vector<1x1x1xf32>
    %12 = vector.broadcast %11 : f32 to vector<1x1xf32>
    %13 = arith.addf %6, %12 : vector<1x1xf32>
    %c0_6 = arith.constant 0 : index
    %c0_7 = arith.constant 0 : index
    %14 = vector.load %arg3[%c0_6, %c0_7] : memref<1x1xf32, #tpu.memory_space<vmem>>, vector<1x1xf32>
    tpu.vector_store %arg3[%c0_6, %c0_7], %13 {strides = array<i32>} : memref<1x1xf32, #tpu.memory_space<vmem>>, vector<1x1xf32>,
    return
  }
  func.func @transform_0(%arg0: i32) -> (i32, i32) {
    %c0_i32 = arith.constant 0 : i32
    %c0_i32_0 = arith.constant 0 : i32
    return %arg0, %c0_i32 : i32, i32
  }
  func.func @transform_1(%arg0: i32) -> (i32, i32) {
    %c0_i32 = arith.constant 0 : i32
    %c0_i32_0 = arith.constant 0 : i32
    return %arg0, %c0_i32 : i32, i32
  }
  func.func @transform_2(%arg0: i32) -> (i32, i32) {
    %c0_i32 = arith.constant 0 : i32
    %c0_i32_0 = arith.constant 0 : i32
    %c0_i32_1 = arith.constant 0 : i32
    return %c0_i32, %c0_i32_0 : i32, i32
  }
}

module attributes {stable_mosaic.version = 11 : i64} {
  func.func @_fused_danet_kernel(%arg0: i32, %arg1: i32, %arg2: memref<1x20x4x20xbf16, #tpu.memory_space<vmem>>, %arg3: memref<9x16x4xbf16, #tpu.memory_space<vmem>>, %arg4: memref<16x1xf32, #tpu.memory_space<vmem>>, %arg5: memref<9x8x16xbf16, #tpu.memory_space<vmem>>, %arg6: memref<8x1xf32, #tpu.memory_space<vmem>>, %arg7: memref<8x1xf32, #tpu.memory_space<vmem>>, %arg8: memref<1x1xf32, #tpu.memory_space<vmem>>, %arg9: memref<1x8x16xf32, #tpu.memory_space<vmem>>, %arg10: memref<10x16x18xbf16, #tpu.memory_space<vmem>>) attributes {dimension_semantics = [#tpu.dimension_semantics<parallel>, #tpu.dimension_semantics<parallel>], iteration_bounds = array<i64: 2, 2>, scalar_prefetch = 0 : i64, scratch_operands = 1 : i64, tpu.core_type = #tpu.core_type<tc>, window_params = [{transform_indices = @transform_0, window_bounds = array<i64: 1, 20, 4, 20>}, {pipeline_mode = #tpu.pipeline_mode<synchronous>, transform_indices = @transform_1, window_bounds = array<i64: 9, 16, 4>}, {pipeline_mode = #tpu.pipeline_mode<synchronous>, transform_indices = @transform_2, window_bounds = array<i64: 16, 1>}, {pipeline_mode = #tpu.pipeline_mode<synchronous>, transform_indices = @transform_3, window_bounds = array<i64: 9, 8, 16>}, {pipeline_mode = #tpu.pipeline_mode<synchronous>, transform_indices = @transform_4, window_bounds = array<i64: 8, 1>}, {pipeline_mode = #tpu.pipeline_mode<synchronous>, transform_indices = @transform_5, window_bounds = array<i64: 8, 1>}, {pipeline_mode = #tpu.pipeline_mode<synchronous>, transform_indices = @transform_6, window_bounds = array<i64: 1, 1>}, {transform_indices = @transform_7, window_bounds = array<i64: 1, 8, 16>}]} {
    %c8_i32 = arith.constant 8 : i32
    %0 = arith.muli %arg1, %c8_i32 : i32
    %1 = tpu.assume_multiple %0, 8 : i32
    %c0 = arith.constant 0 : index
    %c0_0 = arith.constant 0 : index
    %c0_1 = arith.constant 0 : index
    %2 = vector.load %arg3[%c0, %c0_0, %c0_1] : memref<9x16x4xbf16, #tpu.memory_space<vmem>>, vector<1x16x4xbf16>
    %3 = vector.shape_cast %2 : vector<1x16x4xbf16> to vector<16x4xbf16>
    %c1 = arith.constant 1 : index
    %c0_2 = arith.constant 0 : index
    %c0_3 = arith.constant 0 : index
    %4 = vector.load %arg3[%c1, %c0_2, %c0_3] : memref<9x16x4xbf16, #tpu.memory_space<vmem>>, vector<1x16x4xbf16>
    %5 = vector.shape_cast %4 : vector<1x16x4xbf16> to vector<16x4xbf16>
    %c2 = arith.constant 2 : index
    %c0_4 = arith.constant 0 : index
    %c0_5 = arith.constant 0 : index
    %6 = vector.load %arg3[%c2, %c0_4, %c0_5] : memref<9x16x4xbf16, #tpu.memory_space<vmem>>, vector<1x16x4xbf16>
    %7 = vector.shape_cast %6 : vector<1x16x4xbf16> to vector<16x4xbf16>
    %c3 = arith.constant 3 : index
    %c0_6 = arith.constant 0 : index
    %c0_7 = arith.constant 0 : index
    %8 = vector.load %arg3[%c3, %c0_6, %c0_7] : memref<9x16x4xbf16, #tpu.memory_space<vmem>>, vector<1x16x4xbf16>
    %9 = vector.shape_cast %8 : vector<1x16x4xbf16> to vector<16x4xbf16>
    %c4 = arith.constant 4 : index
    %c0_8 = arith.constant 0 : index
    %c0_9 = arith.constant 0 : index
    %10 = vector.load %arg3[%c4, %c0_8, %c0_9] : memref<9x16x4xbf16, #tpu.memory_space<vmem>>, vector<1x16x4xbf16>
    %11 = vector.shape_cast %10 : vector<1x16x4xbf16> to vector<16x4xbf16>
    %c5 = arith.constant 5 : index
    %c0_10 = arith.constant 0 : index
    %c0_11 = arith.constant 0 : index
    %12 = vector.load %arg3[%c5, %c0_10, %c0_11] : memref<9x16x4xbf16, #tpu.memory_space<vmem>>, vector<1x16x4xbf16>
    %13 = vector.shape_cast %12 : vector<1x16x4xbf16> to vector<16x4xbf16>
    %c6 = arith.constant 6 : index
    %c0_12 = arith.constant 0 : index
    %c0_13 = arith.constant 0 : index
    %14 = vector.load %arg3[%c6, %c0_12, %c0_13] : memref<9x16x4xbf16, #tpu.memory_space<vmem>>, vector<1x16x4xbf16>
    %15 = vector.shape_cast %14 : vector<1x16x4xbf16> to vector<16x4xbf16>
    %c7 = arith.constant 7 : index
    %c0_14 = arith.constant 0 : index
    %c0_15 = arith.constant 0 : index
    %16 = vector.load %arg3[%c7, %c0_14, %c0_15] : memref<9x16x4xbf16, #tpu.memory_space<vmem>>, vector<1x16x4xbf16>
    %17 = vector.shape_cast %16 : vector<1x16x4xbf16> to vector<16x4xbf16>
    %c8 = arith.constant 8 : index
    %c0_16 = arith.constant 0 : index
    %c0_17 = arith.constant 0 : index
    %18 = vector.load %arg3[%c8, %c0_16, %c0_17] : memref<9x16x4xbf16, #tpu.memory_space<vmem>>, vector<1x16x4xbf16>
    %19 = vector.shape_cast %18 : vector<1x16x4xbf16> to vector<16x4xbf16>
    %c0_18 = arith.constant 0 : index
    %c0_19 = arith.constant 0 : index
    %c0_20 = arith.constant 0 : index
    %20 = vector.load %arg5[%c0_18, %c0_19, %c0_20] : memref<9x8x16xbf16, #tpu.memory_space<vmem>>, vector<1x8x16xbf16>
    %21 = vector.shape_cast %20 : vector<1x8x16xbf16> to vector<8x16xbf16>
    %c1_21 = arith.constant 1 : index
    %c0_22 = arith.constant 0 : index
    %c0_23 = arith.constant 0 : index
    %22 = vector.load %arg5[%c1_21, %c0_22, %c0_23] : memref<9x8x16xbf16, #tpu.memory_space<vmem>>, vector<1x8x16xbf16>
    %23 = vector.shape_cast %22 : vector<1x8x16xbf16> to vector<8x16xbf16>
    %c2_24 = arith.constant 2 : index
    %c0_25 = arith.constant 0 : index
    %c0_26 = arith.constant 0 : index
    %24 = vector.load %arg5[%c2_24, %c0_25, %c0_26] : memref<9x8x16xbf16, #tpu.memory_space<vmem>>, vector<1x8x16xbf16>
    %25 = vector.shape_cast %24 : vector<1x8x16xbf16> to vector<8x16xbf16>
    %c3_27 = arith.constant 3 : index
    %c0_28 = arith.constant 0 : index
    %c0_29 = arith.constant 0 : index
    %26 = vector.load %arg5[%c3_27, %c0_28, %c0_29] : memref<9x8x16xbf16, #tpu.memory_space<vmem>>, vector<1x8x16xbf16>
    %27 = vector.shape_cast %26 : vector<1x8x16xbf16> to vector<8x16xbf16>
    %c4_30 = arith.constant 4 : index
    %c0_31 = arith.constant 0 : index
    %c0_32 = arith.constant 0 : index
    %28 = vector.load %arg5[%c4_30, %c0_31, %c0_32] : memref<9x8x16xbf16, #tpu.memory_space<vmem>>, vector<1x8x16xbf16>
    %29 = vector.shape_cast %28 : vector<1x8x16xbf16> to vector<8x16xbf16>
    %c5_33 = arith.constant 5 : index
    %c0_34 = arith.constant 0 : index
    %c0_35 = arith.constant 0 : index
    %30 = vector.load %arg5[%c5_33, %c0_34, %c0_35] : memref<9x8x16xbf16, #tpu.memory_space<vmem>>, vector<1x8x16xbf16>
    %31 = vector.shape_cast %30 : vector<1x8x16xbf16> to vector<8x16xbf16>
    %c6_36 = arith.constant 6 : index
    %c0_37 = arith.constant 0 : index
    %c0_38 = arith.constant 0 : index
    %32 = vector.load %arg5[%c6_36, %c0_37, %c0_38] : memref<9x8x16xbf16, #tpu.memory_space<vmem>>, vector<1x8x16xbf16>
    %33 = vector.shape_cast %32 : vector<1x8x16xbf16> to vector<8x16xbf16>
    %c7_39 = arith.constant 7 : index
    %c0_40 = arith.constant 0 : index
    %c0_41 = arith.constant 0 : index
    %34 = vector.load %arg5[%c7_39, %c0_40, %c0_41] : memref<9x8x16xbf16, #tpu.memory_space<vmem>>, vector<1x8x16xbf16>
    %35 = vector.shape_cast %34 : vector<1x8x16xbf16> to vector<8x16xbf16>
    %c8_42 = arith.constant 8 : index
    %c0_43 = arith.constant 0 : index
    %c0_44 = arith.constant 0 : index
    %36 = vector.load %arg5[%c8_42, %c0_43, %c0_44] : memref<9x8x16xbf16, #tpu.memory_space<vmem>>, vector<1x8x16xbf16>
    %37 = vector.shape_cast %36 : vector<1x8x16xbf16> to vector<8x16xbf16>
    %c0_45 = arith.constant 0 : index
    %c0_46 = arith.constant 0 : index
    %38 = vector.load %arg4[%c0_45, %c0_46] : memref<16x1xf32, #tpu.memory_space<vmem>>, vector<16x1xf32>
    %c0_47 = arith.constant 0 : index
    %c0_48 = arith.constant 0 : index
    %39 = vector.load %arg6[%c0_47, %c0_48] : memref<8x1xf32, #tpu.memory_space<vmem>>, vector<8x1xf32>
    %c0_49 = arith.constant 0 : index
    %c0_50 = arith.constant 0 : index
    %40 = vector.load %arg7[%c0_49, %c0_50] : memref<8x1xf32, #tpu.memory_space<vmem>>, vector<8x1xf32>
    %c0_51 = arith.constant 0 : index
    %c0_52 = arith.constant 0 : index
    %41 = vector.load %arg8[%c0_51, %c0_52] : memref<1x1xf32, #tpu.memory_space<vmem>>, vector<1x1xf32>
    %42 = tpu.iota {dimensions = array<i32: 1>} : vector<16x18xi32>
    %c1_i32 = arith.constant 1 : i32
    %43 = vector.broadcast %c1_i32 : i32 to vector<16x18xi32>
    %44 = arith.cmpi sge, %42, %43 : vector<16x18xi32>
    %c16_i32 = arith.constant 16 : i32
    %45 = vector.broadcast %c16_i32 : i32 to vector<16x18xi32>
    %46 = arith.cmpi sle, %42, %45 : vector<16x18xi32>
    %47 = arith.andi %44, %46 : vector<16x18xi1>
    %c0_i32 = arith.constant 0 : i32
    %c10_i32 = arith.constant 10 : i32
    %48 = arith.addi %c0_i32, %c10_i32 : i32
    %c1_i32_53 = arith.constant 1 : i32
    scf.for %arg11 = %c0_i32 to %48 step %c1_i32_53  : i32 {
      %cst = arith.constant 0.000000e+00 : f32
      %50 = vector.broadcast %cst : f32 to vector<16x18xf32>
      %51 = arith.addi %1, %arg11 : i32
      %c0_i32_59 = arith.constant 0 : i32
      %52 = arith.addi %51, %c0_i32_59 : i32
      %c0_60 = arith.constant 0 : index
      %53 = arith.index_cast %52 : i32 to index
      %c0_61 = arith.constant 0 : index
      %c0_62 = arith.constant 0 : index
      %54 = vector.load %arg2[%c0_60, %53, %c0_61, %c0_62] : memref<1x20x4x20xbf16, #tpu.memory_space<vmem>>, vector<1x1x4x20xbf16>
      %55 = vector.shape_cast %54 : vector<1x1x4x20xbf16> to vector<4x20xbf16>
      %56 = vector.extract_strided_slice %55 {offsets = [0, 0], sizes = [4, 18], strides = [1, 1]} : vector<4x20xbf16> to vector<4x18xbf16>
      %cst_63 = arith.constant dense<0.000000e+00> : vector<16x18xf32>
      %57 = tpu.matmul %3, %56, %cst_63 {dimension_numbers = #tpu.dot_dimension_numbers<[1], [0], [0], [1], [0, 0, 1, 1], [], []>} : vector<16x4xbf16>, vector<4x18xbf16>, vector<16x18xf32> -> vector<16x18xf32>
      %58 = arith.addf %50, %57 : vector<16x18xf32>
      %59 = vector.extract_strided_slice %55 {offsets = [0, 1], sizes = [4, 18], strides = [1, 1]} : vector<4x20xbf16> to vector<4x18xbf16>
      %cst_64 = arith.constant dense<0.000000e+00> : vector<16x18xf32>
      %60 = tpu.matmul %5, %59, %cst_64 {dimension_numbers = #tpu.dot_dimension_numbers<[1], [0], [0], [1], [0, 0, 1, 1], [], []>} : vector<16x4xbf16>, vector<4x18xbf16>, vector<16x18xf32> -> vector<16x18xf32>
      %61 = arith.addf %58, %60 : vector<16x18xf32>
      %62 = vector.extract_strided_slice %55 {offsets = [0, 2], sizes = [4, 18], strides = [1, 1]} : vector<4x20xbf16> to vector<4x18xbf16>
      %cst_65 = arith.constant dense<0.000000e+00> : vector<16x18xf32>
      %63 = tpu.matmul %7, %62, %cst_65 {dimension_numbers = #tpu.dot_dimension_numbers<[1], [0], [0], [1], [0, 0, 1, 1], [], []>} : vector<16x4xbf16>, vector<4x18xbf16>, vector<16x18xf32> -> vector<16x18xf32>
      %64 = arith.addf %61, %63 : vector<16x18xf32>
      %65 = arith.addi %1, %arg11 : i32
      %c1_i32_66 = arith.constant 1 : i32
      %66 = arith.addi %65, %c1_i32_66 : i32
      %c0_67 = arith.constant 0 : index
      %67 = arith.index_cast %66 : i32 to index
      %c0_68 = arith.constant 0 : index
      %c0_69 = arith.constant 0 : index
      %68 = vector.load %arg2[%c0_67, %67, %c0_68, %c0_69] : memref<1x20x4x20xbf16, #tpu.memory_space<vmem>>, vector<1x1x4x20xbf16>
      %69 = vector.shape_cast %68 : vector<1x1x4x20xbf16> to vector<4x20xbf16>
      %70 = vector.extract_strided_slice %69 {offsets = [0, 0], sizes = [4, 18], strides = [1, 1]} : vector<4x20xbf16> to vector<4x18xbf16>
      %cst_70 = arith.constant dense<0.000000e+00> : vector<16x18xf32>
      %71 = tpu.matmul %9, %70, %cst_70 {dimension_numbers = #tpu.dot_dimension_numbers<[1], [0], [0], [1], [0, 0, 1, 1], [], []>} : vector<16x4xbf16>, vector<4x18xbf16>, vector<16x18xf32> -> vector<16x18xf32>
      %72 = arith.addf %64, %71 : vector<16x18xf32>
      %73 = vector.extract_strided_slice %69 {offsets = [0, 1], sizes = [4, 18], strides = [1, 1]} : vector<4x20xbf16> to vector<4x18xbf16>
      %cst_71 = arith.constant dense<0.000000e+00> : vector<16x18xf32>
      %74 = tpu.matmul %11, %73, %cst_71 {dimension_numbers = #tpu.dot_dimension_numbers<[1], [0], [0], [1], [0, 0, 1, 1], [], []>} : vector<16x4xbf16>, vector<4x18xbf16>, vector<16x18xf32> -> vector<16x18xf32>
      %75 = arith.addf %72, %74 : vector<16x18xf32>
      %76 = vector.extract_strided_slice %69 {offsets = [0, 2], sizes = [4, 18], strides = [1, 1]} : vector<4x20xbf16> to vector<4x18xbf16>
      %cst_72 = arith.constant dense<0.000000e+00> : vector<16x18xf32>
      %77 = tpu.matmul %13, %76, %cst_72 {dimension_numbers = #tpu.dot_dimension_numbers<[1], [0], [0], [1], [0, 0, 1, 1], [], []>} : vector<16x4xbf16>, vector<4x18xbf16>, vector<16x18xf32> -> vector<16x18xf32>
      %78 = arith.addf %75, %77 : vector<16x18xf32>
      %79 = arith.addi %1, %arg11 : i32
      %c2_i32 = arith.constant 2 : i32
      %80 = arith.addi %79, %c2_i32 : i32
      %c0_73 = arith.constant 0 : index
      %81 = arith.index_cast %80 : i32 to index
      %c0_74 = arith.constant 0 : index
      %c0_75 = arith.constant 0 : index
      %82 = vector.load %arg2[%c0_73, %81, %c0_74, %c0_75] : memref<1x20x4x20xbf16, #tpu.memory_space<vmem>>, vector<1x1x4x20xbf16>
      %83 = vector.shape_cast %82 : vector<1x1x4x20xbf16> to vector<4x20xbf16>
      %84 = vector.extract_strided_slice %83 {offsets = [0, 0], sizes = [4, 18], strides = [1, 1]} : vector<4x20xbf16> to vector<4x18xbf16>
      %cst_76 = arith.constant dense<0.000000e+00> : vector<16x18xf32>
      %85 = tpu.matmul %15, %84, %cst_76 {dimension_numbers = #tpu.dot_dimension_numbers<[1], [0], [0], [1], [0, 0, 1, 1], [], []>} : vector<16x4xbf16>, vector<4x18xbf16>, vector<16x18xf32> -> vector<16x18xf32>
      %86 = arith.addf %78, %85 : vector<16x18xf32>
      %87 = vector.extract_strided_slice %83 {offsets = [0, 1], sizes = [4, 18], strides = [1, 1]} : vector<4x20xbf16> to vector<4x18xbf16>
      %cst_77 = arith.constant dense<0.000000e+00> : vector<16x18xf32>
      %88 = tpu.matmul %17, %87, %cst_77 {dimension_numbers = #tpu.dot_dimension_numbers<[1], [0], [0], [1], [0, 0, 1, 1], [], []>} : vector<16x4xbf16>, vector<4x18xbf16>, vector<16x18xf32> -> vector<16x18xf32>
      %89 = arith.addf %86, %88 : vector<16x18xf32>
      %90 = vector.extract_strided_slice %83 {offsets = [0, 2], sizes = [4, 18], strides = [1, 1]} : vector<4x20xbf16> to vector<4x18xbf16>
      %cst_78 = arith.constant dense<0.000000e+00> : vector<16x18xf32>
      %91 = tpu.matmul %19, %90, %cst_78 {dimension_numbers = #tpu.dot_dimension_numbers<[1], [0], [0], [1], [0, 0, 1, 1], [], []>} : vector<16x4xbf16>, vector<4x18xbf16>, vector<16x18xf32> -> vector<16x18xf32>
      %92 = arith.addf %89, %91 : vector<16x18xf32>
      %93 = vector.broadcast %38 : vector<16x1xf32> to vector<16x18xf32>
      %94 = arith.addf %92, %93 : vector<16x18xf32>
      %cst_79 = arith.constant 0.000000e+00 : f32
      %95 = vector.broadcast %cst_79 : f32 to vector<16x18xf32>
      %96 = arith.maximumf %94, %95 : vector<16x18xf32>
      %97 = arith.addi %1, %arg11 : i32
      %c1_i32_80 = arith.constant 1 : i32
      %98 = arith.cmpi sge, %97, %c1_i32_80 : i32
      %c16_i32_81 = arith.constant 16 : i32
      %99 = arith.cmpi sle, %97, %c16_i32_81 : i32
      %100 = arith.andi %98, %99 : i1
      %101 = vector.broadcast %100 : i1 to vector<16x18xi1>
      %102 = arith.andi %47, %101 : vector<16x18xi1>
      %cst_82 = arith.constant 0.000000e+00 : f32
      %103 = vector.broadcast %cst_82 : f32 to vector<16x18xf32>
      %104 = arith.select %102, %96, %103 : vector<16x18xi1>, vector<16x18xf32>
      %105 = arith.truncf %104 : vector<16x18xf32> to vector<16x18xbf16>
      %106 = arith.index_cast %arg11 : i32 to index
      %c0_83 = arith.constant 0 : index
      %c0_84 = arith.constant 0 : index
      %107 = vector.load %arg10[%106, %c0_83, %c0_84] : memref<10x16x18xbf16, #tpu.memory_space<vmem>>, vector<1x16x18xbf16>
      %108 = vector.shape_cast %107 : vector<1x16x18xbf16> to vector<16x18xbf16>
      %109 = vector.shape_cast %105 : vector<16x18xbf16> to vector<1x16x18xbf16>
      tpu.vector_store %arg10[%106, %c0_83, %c0_84], %109 {strides = array<i32>} : memref<10x16x18xbf16, #tpu.memory_space<vmem>>, vector<1x16x18xbf16>,
    }
    %c10_i32_54 = arith.constant 10 : i32
    %c0_i32_55 = arith.constant 0 : i32
    %c8_i32_56 = arith.constant 8 : i32
    %49 = arith.addi %c0_i32_55, %c8_i32_56 : i32
    %c1_i32_57 = arith.constant 1 : i32
    scf.for %arg11 = %c0_i32_55 to %49 step %c1_i32_57  : i32 {
      %cst = arith.constant 0.000000e+00 : f32
      %50 = vector.broadcast %cst : f32 to vector<8x16xf32>
      %c0_i32_59 = arith.constant 0 : i32
      %51 = arith.addi %arg11, %c0_i32_59 : i32
      %52 = arith.index_cast %51 : i32 to index
      %c0_60 = arith.constant 0 : index
      %c0_61 = arith.constant 0 : index
      %53 = vector.load %arg10[%52, %c0_60, %c0_61] : memref<10x16x18xbf16, #tpu.memory_space<vmem>>, vector<1x16x18xbf16>
      %54 = vector.shape_cast %53 : vector<1x16x18xbf16> to vector<16x18xbf16>
      %55 = vector.extract_strided_slice %54 {offsets = [0, 0], sizes = [16, 16], strides = [1, 1]} : vector<16x18xbf16> to vector<16x16xbf16>
      %cst_62 = arith.constant dense<0.000000e+00> : vector<8x16xf32>
      %56 = tpu.matmul %21, %55, %cst_62 {dimension_numbers = #tpu.dot_dimension_numbers<[1], [0], [0], [1], [0, 0, 1, 1], [], []>} : vector<8x16xbf16>, vector<16x16xbf16>, vector<8x16xf32> -> vector<8x16xf32>
      %57 = arith.addf %50, %56 : vector<8x16xf32>
      %58 = vector.extract_strided_slice %54 {offsets = [0, 1], sizes = [16, 16], strides = [1, 1]} : vector<16x18xbf16> to vector<16x16xbf16>
      %cst_63 = arith.constant dense<0.000000e+00> : vector<8x16xf32>
      %59 = tpu.matmul %23, %58, %cst_63 {dimension_numbers = #tpu.dot_dimension_numbers<[1], [0], [0], [1], [0, 0, 1, 1], [], []>} : vector<8x16xbf16>, vector<16x16xbf16>, vector<8x16xf32> -> vector<8x16xf32>
      %60 = arith.addf %57, %59 : vector<8x16xf32>
      %61 = vector.extract_strided_slice %54 {offsets = [0, 2], sizes = [16, 16], strides = [1, 1]} : vector<16x18xbf16> to vector<16x16xbf16>
      %cst_64 = arith.constant dense<0.000000e+00> : vector<8x16xf32>
      %62 = tpu.matmul %25, %61, %cst_64 {dimension_numbers = #tpu.dot_dimension_numbers<[1], [0], [0], [1], [0, 0, 1, 1], [], []>} : vector<8x16xbf16>, vector<16x16xbf16>, vector<8x16xf32> -> vector<8x16xf32>
      %63 = arith.addf %60, %62 : vector<8x16xf32>
      %c1_i32_65 = arith.constant 1 : i32
      %64 = arith.addi %arg11, %c1_i32_65 : i32
      %65 = arith.index_cast %64 : i32 to index
      %c0_66 = arith.constant 0 : index
      %c0_67 = arith.constant 0 : index
      %66 = vector.load %arg10[%65, %c0_66, %c0_67] : memref<10x16x18xbf16, #tpu.memory_space<vmem>>, vector<1x16x18xbf16>
      %67 = vector.shape_cast %66 : vector<1x16x18xbf16> to vector<16x18xbf16>
      %68 = vector.extract_strided_slice %67 {offsets = [0, 0], sizes = [16, 16], strides = [1, 1]} : vector<16x18xbf16> to vector<16x16xbf16>
      %cst_68 = arith.constant dense<0.000000e+00> : vector<8x16xf32>
      %69 = tpu.matmul %27, %68, %cst_68 {dimension_numbers = #tpu.dot_dimension_numbers<[1], [0], [0], [1], [0, 0, 1, 1], [], []>} : vector<8x16xbf16>, vector<16x16xbf16>, vector<8x16xf32> -> vector<8x16xf32>
      %70 = arith.addf %63, %69 : vector<8x16xf32>
      %71 = vector.extract_strided_slice %67 {offsets = [0, 1], sizes = [16, 16], strides = [1, 1]} : vector<16x18xbf16> to vector<16x16xbf16>
      %cst_69 = arith.constant dense<0.000000e+00> : vector<8x16xf32>
      %72 = tpu.matmul %29, %71, %cst_69 {dimension_numbers = #tpu.dot_dimension_numbers<[1], [0], [0], [1], [0, 0, 1, 1], [], []>} : vector<8x16xbf16>, vector<16x16xbf16>, vector<8x16xf32> -> vector<8x16xf32>
      %73 = arith.addf %70, %72 : vector<8x16xf32>
      %74 = vector.extract_strided_slice %67 {offsets = [0, 2], sizes = [16, 16], strides = [1, 1]} : vector<16x18xbf16> to vector<16x16xbf16>
      %cst_70 = arith.constant dense<0.000000e+00> : vector<8x16xf32>
      %75 = tpu.matmul %31, %74, %cst_70 {dimension_numbers = #tpu.dot_dimension_numbers<[1], [0], [0], [1], [0, 0, 1, 1], [], []>} : vector<8x16xbf16>, vector<16x16xbf16>, vector<8x16xf32> -> vector<8x16xf32>
      %76 = arith.addf %73, %75 : vector<8x16xf32>
      %c2_i32 = arith.constant 2 : i32
      %77 = arith.addi %arg11, %c2_i32 : i32
      %78 = arith.index_cast %77 : i32 to index
      %c0_71 = arith.constant 0 : index
      %c0_72 = arith.constant 0 : index
      %79 = vector.load %arg10[%78, %c0_71, %c0_72] : memref<10x16x18xbf16, #tpu.memory_space<vmem>>, vector<1x16x18xbf16>
      %80 = vector.shape_cast %79 : vector<1x16x18xbf16> to vector<16x18xbf16>
      %81 = vector.extract_strided_slice %80 {offsets = [0, 0], sizes = [16, 16], strides = [1, 1]} : vector<16x18xbf16> to vector<16x16xbf16>
      %cst_73 = arith.constant dense<0.000000e+00> : vector<8x16xf32>
      %82 = tpu.matmul %33, %81, %cst_73 {dimension_numbers = #tpu.dot_dimension_numbers<[1], [0], [0], [1], [0, 0, 1, 1], [], []>} : vector<8x16xbf16>, vector<16x16xbf16>, vector<8x16xf32> -> vector<8x16xf32>
      %83 = arith.addf %76, %82 : vector<8x16xf32>
      %84 = vector.extract_strided_slice %80 {offsets = [0, 1], sizes = [16, 16], strides = [1, 1]} : vector<16x18xbf16> to vector<16x16xbf16>
      %cst_74 = arith.constant dense<0.000000e+00> : vector<8x16xf32>
      %85 = tpu.matmul %35, %84, %cst_74 {dimension_numbers = #tpu.dot_dimension_numbers<[1], [0], [0], [1], [0, 0, 1, 1], [], []>} : vector<8x16xbf16>, vector<16x16xbf16>, vector<8x16xf32> -> vector<8x16xf32>
      %86 = arith.addf %83, %85 : vector<8x16xf32>
      %87 = vector.extract_strided_slice %80 {offsets = [0, 2], sizes = [16, 16], strides = [1, 1]} : vector<16x18xbf16> to vector<16x16xbf16>
      %cst_75 = arith.constant dense<0.000000e+00> : vector<8x16xf32>
      %88 = tpu.matmul %37, %87, %cst_75 {dimension_numbers = #tpu.dot_dimension_numbers<[1], [0], [0], [1], [0, 0, 1, 1], [], []>} : vector<8x16xbf16>, vector<16x16xbf16>, vector<8x16xf32> -> vector<8x16xf32>
      %89 = arith.addf %86, %88 : vector<8x16xf32>
      %90 = vector.broadcast %39 : vector<8x1xf32> to vector<8x16xf32>
      %91 = arith.addf %89, %90 : vector<8x16xf32>
      %cst_76 = arith.constant 0.000000e+00 : f32
      %92 = vector.broadcast %cst_76 : f32 to vector<8x16xf32>
      %93 = arith.maximumf %91, %92 : vector<8x16xf32>
      %94 = vector.broadcast %40 : vector<8x1xf32> to vector<8x16xf32>
      %95 = arith.mulf %93, %94 : vector<8x16xf32>
      %cst_77 = arith.constant dense<0.000000e+00> : vector<16xf32>
      %96 = vector.multi_reduction <add>, %95, %cst_77 [0] : vector<8x16xf32> to vector<16xf32>
      %97 = vector.shape_cast %96 : vector<16xf32> to vector<1x16xf32>
      %98 = vector.broadcast %41 : vector<1x1xf32> to vector<1x16xf32>
      %99 = arith.addf %97, %98 : vector<1x16xf32>
      %c0_78 = arith.constant 0 : index
      %100 = arith.index_cast %arg11 : i32 to index
      %c0_79 = arith.constant 0 : index
      %101 = vector.load %arg9[%c0_78, %100, %c0_79] : memref<1x8x16xf32, #tpu.memory_space<vmem>>, vector<1x1x16xf32>
      %102 = vector.shape_cast %101 : vector<1x1x16xf32> to vector<1x16xf32>
      %103 = vector.shape_cast %99 : vector<1x16xf32> to vector<1x1x16xf32>
      tpu.vector_store %arg9[%c0_78, %100, %c0_79], %103 {strides = array<i32>} : memref<1x8x16xf32, #tpu.memory_space<vmem>>, vector<1x1x16xf32>,
    }
    %c8_i32_58 = arith.constant 8 : i32
    return
  }
  func.func @transform_0(%arg0: i32, %arg1: i32) -> (i32, i32, i32, i32) {
    %c0_i32 = arith.constant 0 : i32
    %c0_i32_0 = arith.constant 0 : i32
    %c0_i32_1 = arith.constant 0 : i32
    %c0_i32_2 = arith.constant 0 : i32
    return %arg0, %c0_i32, %c0_i32_0, %c0_i32_1 : i32, i32, i32, i32
  }
  func.func @transform_1(%arg0: i32, %arg1: i32) -> (i32, i32, i32) {
    %c0_i32 = arith.constant 0 : i32
    %c0_i32_0 = arith.constant 0 : i32
    %c0_i32_1 = arith.constant 0 : i32
    %c0_i32_2 = arith.constant 0 : i32
    return %c0_i32, %c0_i32_0, %c0_i32_1 : i32, i32, i32
  }
  func.func @transform_2(%arg0: i32, %arg1: i32) -> (i32, i32) {
    %c0_i32 = arith.constant 0 : i32
    %c0_i32_0 = arith.constant 0 : i32
    %c0_i32_1 = arith.constant 0 : i32
    return %c0_i32, %c0_i32_0 : i32, i32
  }
  func.func @transform_3(%arg0: i32, %arg1: i32) -> (i32, i32, i32) {
    %c0_i32 = arith.constant 0 : i32
    %c0_i32_0 = arith.constant 0 : i32
    %c0_i32_1 = arith.constant 0 : i32
    %c0_i32_2 = arith.constant 0 : i32
    return %c0_i32, %c0_i32_0, %c0_i32_1 : i32, i32, i32
  }
  func.func @transform_4(%arg0: i32, %arg1: i32) -> (i32, i32) {
    %c0_i32 = arith.constant 0 : i32
    %c0_i32_0 = arith.constant 0 : i32
    %c0_i32_1 = arith.constant 0 : i32
    return %c0_i32, %c0_i32_0 : i32, i32
  }
  func.func @transform_5(%arg0: i32, %arg1: i32) -> (i32, i32) {
    %c0_i32 = arith.constant 0 : i32
    %c0_i32_0 = arith.constant 0 : i32
    %c0_i32_1 = arith.constant 0 : i32
    return %c0_i32, %c0_i32_0 : i32, i32
  }
  func.func @transform_6(%arg0: i32, %arg1: i32) -> (i32, i32) {
    %c0_i32 = arith.constant 0 : i32
    %c0_i32_0 = arith.constant 0 : i32
    %c0_i32_1 = arith.constant 0 : i32
    return %c0_i32, %c0_i32_0 : i32, i32
  }
  func.func @transform_7(%arg0: i32, %arg1: i32) -> (i32, i32, i32) {
    %c0_i32 = arith.constant 0 : i32
    %c0_i32_0 = arith.constant 0 : i32
    return %arg0, %arg1, %c0_i32 : i32, i32, i32
  }
}

</mosaic_0001>

<llo_original>
// kernel: _lambda_.3
$region0: #{_lambda_.3}
  #allocation0 [shape = 'u32[]', space=smem, size = 0x4, offset = 0x4, fixed_abs, tag = 'smem constant byte address 0x4 - core index']
  #allocation1 [shape = 'u32[144,128]{1,0:T(1,128)}', space=vmem, size = 0x12000, scoped, tag = 'internal scratch']
  %s0 = inlined_call_operand.vmem [shape: f32[8,128], index: 0, kind: input, shape index: {}]
  %s1 = inlined_call_operand.vmem [shape: f32[8,128], index: 1, kind: input, shape index: {}]
  %s2 = inlined_call_operand.hbm [shape: f32[1,1], index: 2, kind: output, shape index: {}]
  %s3 = sld [smem:[#allocation0]]
  $region22: #{_lambda_.3} parent=0
    _
  %s5 = ssub.s32 1, %s3
  %s6 = scalar_select 0, %s5, %s3
  $region1: #{_lambda_.3} parent=0
    #allocation2 [shape = 'u8[512]{0}', space=vmem, size = 0x400, scoped, tag = 'output window, operand 0, single buffered']
    #allocation3 [shape = 's32[1]{0}', space=sflag, size = 0x4, scoped, tag = 'scoped memory for _lambda_.3']
    %7 = vsyncpa [#allocation3], 0
    // Predicated region
    $region2: #{_lambda_.3} parent=1 // pred_check
      _
    $region3: #{_lambda_.3} parent=1 // pred_check_branch
      %9 = sbr.rel (0) target = $region5
    $region4: #{_lambda_.3} parent=1 // pred_region
      _
    $region5: #{_lambda_.3} parent=1 // pred_fallthru
      _
    // Predicated region
    $region6: #{_lambda_.3} parent=1 // pred_check
      _
    $region7: #{_lambda_.3} parent=1 // pred_check_branch
      %11 = sbr.rel (0) target = $region9
    $region8: #{_lambda_.3} parent=1 // pred_region
      _
    $region9: #{_lambda_.3} parent=1 // pred_fallthru
      _
    %p12 = scmp.eq.s32.totalorder 0, 0
    // Predicated region
    $region10: #{_lambda_.3} parent=1 // pred_check
      %p13 = pneg %p12
    $region11: #{_lambda_.3} parent=1 // pred_check_branch
      %15 = sbr.rel (%p13) target = $region13
    $region12: #{_lambda_.3} parent=1 // pred_region
      %vm16 = vcmask 0
      %17 = vst.msk [vmem:[#allocation2] sm:$0x1] %vm16, 0.0
    $region13: #{_lambda_.3} parent=1 // pred_fallthru
      _
    %v18 = vld [vmem:[%s0] sm:$0xff]
    %v19 = vld [vmem:[%s1] sm:$0xff]
    %v20 = vsub.f32 %v18, %v19
    %v21 = vld [vmem:[#allocation2] sm:$0x1]
    %v22 = vmul.f32 %v20, %v20
    %23 = vadd.xlane.f32.xlu0 %v22
    %v24 = vpop.xlane.xlu0 %23
    %v25 = vrot.slane %v24, 4
    %v26 = vadd.f32 %v24, %v25
    %v27 = vrot.slane %v26, 2
    %v28 = vadd.f32 %v26, %v27
    %v29 = vrot.slane %v28, 1
    %v30 = vadd.f32 %v28, %v29
    %s31 = vtos %v30
    %v32 = vstv %s31
    %v33 = vadd.f32 %v21, %v32
    %vm34 = vcmask 0
    %35 = vst.msk [vmem:[#allocation2] sm:$0x1] %vm34, %v33
    // Predicated region
    $region14: #{_lambda_.3} parent=1 // pred_check
      _
    $region15: #{_lambda_.3} parent=1 // pred_check_branch
      %37 = sbr.rel (0) target = $region17
    $region16: #{_lambda_.3} parent=1 // pred_region
      %s39 = ssub.s32 16, 16
      %40 = vsyncadd [#allocation3], %s39
      %s42 = sshll.u32 [#allocation2], 4
      %s43 = int_to_ptr.vmem [resolvable:$true] %s42
      %45 = dma.vmem_to_hbm [thread:$0]  %s43, 16, %s2, [#allocation3]
    $region17: #{_lambda_.3} parent=1 // pred_fallthru
      _
    // Predicated region
    $region18: #{_lambda_.3} parent=1 // pred_check
      _
    $region19: #{_lambda_.3} parent=1 // pred_check_branch
      %47 = sbr.rel (0) target = $region21
    $region20: #{_lambda_.3} parent=1 // pred_region
      %48 = dma.done [#allocation3], 16
    $region21: #{_lambda_.3} parent=1 // pred_fallthru
      _
    %49 = vsyncpa [#allocation3], 1

// kernel: _lambda_.2
$region0: #{_lambda_.2}
  #allocation0 [shape = 'u32[]', space=smem, size = 0x4, offset = 0x4, fixed_abs, tag = 'smem constant byte address 0x4 - core index']
  #allocation1 [shape = 'u32[144,128]{1,0:T(1,128)}', space=vmem, size = 0x12000, scoped, tag = 'internal scratch']
  #allocation2 [shape = 'bf16[10,16,18]{2,1,0:T(16,128)(2,1)}', space=vmem, size = 0xa000, scoped, tag = 'scratch operand']
  #allocation3 [shape = 'f32[1,1]{1,0:T(1,128)S(1)}', space=vmem, size = 0x200, scoped, tag = 'scoped memory for _lambda_.2']
  %s0 = inlined_call_operand.vmem [shape: bf16[2,20,4,20], index: 0, kind: input, shape index: {}]
  %s1 = inlined_call_operand.vmem [shape: bf16[9,16,4], index: 1, kind: input, shape index: {}]
  %s2 = inlined_call_operand.vmem [shape: f32[16,1], index: 2, kind: input, shape index: {}]
  %s3 = inlined_call_operand.vmem [shape: bf16[9,8,16], index: 3, kind: input, shape index: {}]
  %s4 = inlined_call_operand.vmem [shape: f32[8,1], index: 4, kind: input, shape index: {}]
  %s5 = inlined_call_operand.vmem [shape: f32[8,1], index: 5, kind: input, shape index: {}]
  %s6 = inlined_call_operand.<no memory space> [shape: f32[1,1], index: 6, kind: input, shape index: {}]
  %s7 = inlined_call_operand.vmem [shape: f32[2,16,16], index: 7, kind: output, shape index: {}]
  %s8 = sld [smem:[#allocation0]]
  $region75: #{_lambda_.2} parent=0
    _
  %s10 = ssub.s32 1, %s8
  %s11 = scalar_select 0, %s10, %s8
  %v12 = vstv %s6
  %13 = vst [vmem:[#allocation3] sm:$0x1] %v12
  loop: start=0, step=1, limit=6
  $region2: #{_lambda_.2} parent=0 // loop_pre_header
    _
  $region3: #{_lambda_.2} parent=0 // loop_header
    %s15 = sphi 0, %s19
    %p16 = scmp.ge.s32.totalorder %s15, 6
    %s22 = sphi 0, %s34
    %s23 = sphi 0, %s30
    %s24 = sphi 0, %s22
    %s25 = sphi 0, %s23
    %s26 = sphi 0, %s24
    %s27 = sphi 0, %s25
    %s37 = sphi 0, %s39
    %s40 = sphi 0, %s37
    %s41 = sphi 0, %s40
    %s57 = sphi 0, %s41
    %s61 = sphi 0, %s61
    %s63 = sphi 0, %s61
    %s64 = sphi 0, %s63
    %s78 = sphi 0, %s64
    %s82 = sphi 0, %s82
    %s84 = sphi 0, %s82
    %s85 = sphi 0, %s84
    %s99 = sphi 0, %s85
    %s103 = sphi 0, %s103
    %s105 = sphi 0, %s103
    %s106 = sphi 0, %s105
    %s120 = sphi 0, %s106
    %s124 = sphi 0, %s124
    %s126 = sphi 0, %s124
    %s127 = sphi 0, %s126
    %s141 = sphi 0, %s127
    %s145 = sphi 0, %s145
    %s147 = sphi 0, %s145
    %s148 = sphi 0, %s147
    %s162 = sphi 0, %s148
    %s166 = sphi 0, %s166
    %s168 = sphi 0, %s166
    %s169 = sphi 0, %s168
    %s183 = sphi 0, %s169
    %s191 = sphi 0, %s193
    %s194 = sphi 0, %s191
    %s195 = sphi 0, %s194
    %s211 = sphi 0, %s195
  $region4: #{_lambda_.2} parent=0 // loop_header_branch
    %18 = sbr.rel (%p16) target = $region8
  $region5: #{_lambda_.2} parent=0 // loop_body
    %s20 = ssub.s32 %s15, 1
    %s21 = ssub.s32 %s15, 2
    %s28 = sadd.s32 1, %s23
    %p29 = scmp.ge.s32.totalorder %s28, 2
    %s30 = scalar_select %p29, 0, %s28
    %s31 = sadd.s32 1, %s22
    %s32 = scalar_select %p29, %s31, %s22
    %p33 = scmp.ge.s32.totalorder %s32, 2
    %s34 = scalar_select %p33, 0, %s32
    %s35 = ssub.s32 %s22, %s34
    %p36 = scmp.eq.s32.totalorder %s35, 0
    %s38 = sadd.s32 %s37, 1
    %s39 = scalar_select %p36, %s37, %s38
    %p42 = pneg %p36
    %p43 = scmp.eq.s32.totalorder %s15, 3
    %p44 = por %p42, %p43
    %p45 = scmp.ne.s32.totalorder %s37, %s40
    %p46 = scmp.eq.s32.totalorder %s15, 0
    %p47 = por %p45, %p46
    %p48 = scmp.ne.s32.totalorder %s37, %s40
    %p49 = scmp.eq.s32.totalorder %s20, 3
    %p50 = por %p48, %p49
    %p51 = scmp.ne.s32.totalorder %s40, %s41
    %p52 = scmp.eq.s32.totalorder %s20, 0
    %p53 = por %p51, %p52
    %p54 = scmp.ne.s32.totalorder %s40, %s41
    %p55 = scmp.eq.s32.totalorder %s21, 3
    %p56 = por %p54, %p55
    %p58 = scmp.ne.s32.totalorder %s41, %s57
    %p59 = scmp.eq.s32.totalorder %s21, 0
    %p60 = por %p58, %p59
    %s62 = sadd.s32 %s61, 1
    %p65 = scmp.eq.s32.totalorder %s15, 3
    %p66 = scmp.ne.s32.totalorder %s61, %s63
    %p67 = scmp.eq.s32.totalorder %s15, 0
    %p68 = por %p66, %p67
    %p69 = scmp.ne.s32.totalorder %s61, %s63
    %p70 = scmp.eq.s32.totalorder %s20, 3
    %p71 = por %p69, %p70
    %p72 = scmp.ne.s32.totalorder %s63, %s64
    %p73 = scmp.eq.s32.totalorder %s20, 0
    %p74 = por %p72, %p73
    %p75 = scmp.ne.s32.totalorder %s63, %s64
    %p76 = scmp.eq.s32.totalorder %s21, 3
    %p77 = por %p75, %p76
    %p79 = scmp.ne.s32.totalorder %s64, %s78
    %p80 = scmp.eq.s32.totalorder %s21, 0
    %p81 = por %p79, %p80
    %s83 = sadd.s32 %s82, 1
    %p86 = scmp.eq.s32.totalorder %s15, 3
    %p87 = scmp.ne.s32.totalorder %s82, %s84
    %p88 = scmp.eq.s32.totalorder %s15, 0
    %p89 = por %p87, %p88
    %p90 = scmp.ne.s32.totalorder %s82, %s84
    %p91 = scmp.eq.s32.totalorder %s20, 3
    %p92 = por %p90, %p91
    %p93 = scmp.ne.s32.totalorder %s84, %s85
    %p94 = scmp.eq.s32.totalorder %s20, 0
    %p95 = por %p93, %p94
    %p96 = scmp.ne.s32.totalorder %s84, %s85
    %p97 = scmp.eq.s32.totalorder %s21, 3
    %p98 = por %p96, %p97
    %p100 = scmp.ne.s32.totalorder %s85, %s99
    %p101 = scmp.eq.s32.totalorder %s21, 0
    %p102 = por %p100, %p101
    %s104 = sadd.s32 %s103, 1
    %p107 = scmp.eq.s32.totalorder %s15, 3
    %p108 = scmp.ne.s32.totalorder %s103, %s105
    %p109 = scmp.eq.s32.totalorder %s15, 0
    %p110 = por %p108, %p109
    %p111 = scmp.ne.s32.totalorder %s103, %s105
    %p112 = scmp.eq.s32.totalorder %s20, 3
    %p113 = por %p111, %p112
    %p114 = scmp.ne.s32.totalorder %s105, %s106
    %p115 = scmp.eq.s32.totalorder %s20, 0
    %p116 = por %p114, %p115
    %p117 = scmp.ne.s32.totalorder %s105, %s106
    %p118 = scmp.eq.s32.totalorder %s21, 3
    %p119 = por %p117, %p118
    %p121 = scmp.ne.s32.totalorder %s106, %s120
    %p122 = scmp.eq.s32.totalorder %s21, 0
    %p123 = por %p121, %p122
    %s125 = sadd.s32 %s124, 1
    %p128 = scmp.eq.s32.totalorder %s15, 3
    %p129 = scmp.ne.s32.totalorder %s124, %s126
    %p130 = scmp.eq.s32.totalorder %s15, 0
    %p131 = por %p129, %p130
    %p132 = scmp.ne.s32.totalorder %s124, %s126
    %p133 = scmp.eq.s32.totalorder %s20, 3
    %p134 = por %p132, %p133
    %p135 = scmp.ne.s32.totalorder %s126, %s127
    %p136 = scmp.eq.s32.totalorder %s20, 0
    %p137 = por %p135, %p136
    %p138 = scmp.ne.s32.totalorder %s126, %s127
    %p139 = scmp.eq.s32.totalorder %s21, 3
    %p140 = por %p138, %p139
    %p142 = scmp.ne.s32.totalorder %s127, %s141
    %p143 = scmp.eq.s32.totalorder %s21, 0
    %p144 = por %p142, %p143
    %s146 = sadd.s32 %s145, 1
    %p149 = scmp.eq.s32.totalorder %s15, 3
    %p150 = scmp.ne.s32.totalorder %s145, %s147
    %p151 = scmp.eq.s32.totalorder %s15, 0
    %p152 = por %p150, %p151
    %p153 = scmp.ne.s32.totalorder %s145, %s147
    %p154 = scmp.eq.s32.totalorder %s20, 3
    %p155 = por %p153, %p154
    %p156 = scmp.ne.s32.totalorder %s147, %s148
    %p157 = scmp.eq.s32.totalorder %s20, 0
    %p158 = por %p156, %p157
    %p159 = scmp.ne.s32.totalorder %s147, %s148
    %p160 = scmp.eq.s32.totalorder %s21, 3
    %p161 = por %p159, %p160
    %p163 = scmp.ne.s32.totalorder %s148, %s162
    %p164 = scmp.eq.s32.totalorder %s21, 0
    %p165 = por %p163, %p164
    %s167 = sadd.s32 %s166, 1
    %p170 = scmp.eq.s32.totalorder %s15, 3
    %p171 = scmp.ne.s32.totalorder %s166, %s168
    %p172 = scmp.eq.s32.totalorder %s15, 0
    %p173 = por %p171, %p172
    %p174 = scmp.ne.s32.totalorder %s166, %s168
    %p175 = scmp.eq.s32.totalorder %s20, 3
    %p176 = por %p174, %p175
    %p177 = scmp.ne.s32.totalorder %s168, %s169
    %p178 = scmp.eq.s32.totalorder %s20, 0
    %p179 = por %p177, %p178
    %p180 = scmp.ne.s32.totalorder %s168, %s169
    %p181 = scmp.eq.s32.totalorder %s21, 3
    %p182 = por %p180, %p181
    %p184 = scmp.ne.s32.totalorder %s169, %s183
    %p185 = scmp.eq.s32.totalorder %s21, 0
    %p186 = por %p184, %p185
    %s187 = ssub.s32 %s22, %s34
    %s188 = ssub.s32 %s23, %s30
    %s189 = sor.u32 %s187, %s188
    %p190 = scmp.eq.s32.totalorder %s189, 0
    %s192 = sadd.s32 %s191, 1
    %s193 = scalar_select %p190, %s191, %s192
    %p196 = pneg %p190
    %p197 = scmp.eq.s32.totalorder %s15, 3
    %p198 = por %p196, %p197
    %p199 = scmp.ne.s32.totalorder %s191, %s194
    %p200 = scmp.eq.s32.totalorder %s15, 0
    %p201 = por %p199, %p200
    %p202 = scmp.ne.s32.totalorder %s191, %s194
    %p203 = scmp.eq.s32.totalorder %s20, 3
    %p204 = por %p202, %p203
    %p205 = scmp.ne.s32.totalorder %s194, %s195
    %p206 = scmp.eq.s32.totalorder %s20, 0
    %p207 = por %p205, %p206
    %p208 = scmp.ne.s32.totalorder %s194, %s195
    %p209 = scmp.eq.s32.totalorder %s21, 3
    %p210 = por %p208, %p209
    %p212 = scmp.ne.s32.totalorder %s195, %s211
    %p213 = scmp.eq.s32.totalorder %s21, 0
    %p214 = por %p212, %p213
    %p215 = scmp.le.s32.totalorder 1, %s15
    %p216 = scmp.lt.s32.totalorder %s15, 5
    %p217 = pnand %p215, %p216
    %p218 = pneg %p217
    // Predicated region
    $region9: #{_lambda_.2} parent=5 // pred_check
      _
    $region10: #{_lambda_.2} parent=5 // pred_check_branch
      %220 = sbr.rel (%p217) target = $region12
    $region11: #{_lambda_.2} parent=5 // pred_region
      %s221 = ssub.s32 %s15, 1
      // Predicated region
      $region13: #{_lambda_.2} parent=11 // pred_check
        %p222 = pneg %p74
      $region14: #{_lambda_.2} parent=11 // pred_check_branch
        %224 = sbr.rel (%p222) target = $region16
      $region15: #{_lambda_.2} parent=11 // pred_region
        _
      $region16: #{_lambda_.2} parent=11 // pred_fallthru
        _
      // Predicated region
      $region17: #{_lambda_.2} parent=11 // pred_check
        %p225 = pneg %p95
      $region18: #{_lambda_.2} parent=11 // pred_check_branch
        %227 = sbr.rel (%p225) target = $region20
      $region19: #{_lambda_.2} parent=11 // pred_region
        _
      $region20: #{_lambda_.2} parent=11 // pred_fallthru
        _
      // Predicated region
      $region21: #{_lambda_.2} parent=11 // pred_check
        %p228 = pneg %p116
      $region22: #{_lambda_.2} parent=11 // pred_check_branch
        %230 = sbr.rel (%p228) target = $region24
      $region23: #{_lambda_.2} parent=11 // pred_region
        _
      $region24: #{_lambda_.2} parent=11 // pred_fallthru
        _
      // Predicated region
      $region25: #{_lambda_.2} parent=11 // pred_check
        %p231 = pneg %p137
      $region26: #{_lambda_.2} parent=11 // pred_check_branch
        %233 = sbr.rel (%p231) target = $region28
      $region27: #{_lambda_.2} parent=11 // pred_region
        _
      $region28: #{_lambda_.2} parent=11 // pred_fallthru
        _
      // Predicated region
      $region29: #{_lambda_.2} parent=11 // pred_check
        %p234 = pneg %p158
      $region30: #{_lambda_.2} parent=11 // pred_check_branch
        %236 = sbr.rel (%p234) target = $region32
      $region31: #{_lambda_.2} parent=11 // pred_region
        _
      $region32: #{_lambda_.2} parent=11 // pred_fallthru
        _
      // Predicated region
      $region33: #{_lambda_.2} parent=11 // pred_check
        %p237 = pneg %p179
      $region34: #{_lambda_.2} parent=11 // pred_check_branch
        %239 = sbr.rel (%p237) target = $region36
      $region35: #{_lambda_.2} parent=11 // pred_region
        _
      $region36: #{_lambda_.2} parent=11 // pred_fallthru
        _
    $region12: #{_lambda_.2} parent=5 // pred_fallthru
      _
    %p240 = scmp.lt.s32.totalorder %s15, 4
    // Predicated region
    $region37: #{_lambda_.2} parent=5 // pred_check
      %p241 = pneg %p240
    $region38: #{_lambda_.2} parent=5 // pred_check_branch
      %243 = sbr.rel (%p241) target = $region40
    $region39: #{_lambda_.2} parent=5 // pred_region
      // Predicated region
      $region41: #{_lambda_.2} parent=39 // pred_check
        %p244 = pneg %p47
      $region42: #{_lambda_.2} parent=39 // pred_check_branch
        %246 = sbr.rel (%p244) target = $region44
      $region43: #{_lambda_.2} parent=39 // pred_region
        %p247 = scmp.lt.s32.totalorder %s22, 1
        %s248 = scalar_select %p247, %s22, 1
        %s249 = smul.addr %s248, 20
        %s250 = smul.addr %s249, 2
        %s251 = scalar_lea.vmem %s0, %s250
      $region44: #{_lambda_.2} parent=39 // pred_fallthru
        _
    $region40: #{_lambda_.2} parent=5 // pred_fallthru
      _
    %p252 = scmp.le.s32.totalorder 1, %s15
    %p253 = scmp.lt.s32.totalorder %s15, 5
    %p254 = pnand %p252, %p253
    %p255 = pneg %p254
    // Predicated region
    $region45: #{_lambda_.2} parent=5 // pred_check
      _
    $region46: #{_lambda_.2} parent=5 // pred_check_branch
      %257 = sbr.rel (%p254) target = $region48
    $region47: #{_lambda_.2} parent=5 // pred_region
      %s258 = ssub.s32 %s15, 1
      %p259 = scmp.lt.s32.totalorder %s24, 1
      %s260 = scalar_select %p259, %s24, 1
      %s261 = smul.addr %s260, 20
      %s262 = smul.addr %s261, 2
      %s263 = scalar_lea.vmem %s0, %s262
      %p264 = pneg %p53
      %p265 = pneg %p50
      %p266 = pneg %p74
      %p267 = pneg %p71
      %p268 = pneg %p95
      %p269 = pneg %p92
      %p270 = pneg %p116
      %p271 = pneg %p113
      %p272 = pneg %p137
      %p273 = pneg %p134
      %p274 = pneg %p158
      %p275 = pneg %p155
      %p276 = pneg %p179
      %p277 = pneg %p176
      %p278 = pneg %p207
      %p279 = pneg %p204
      %p280 = scmp.lt.s32.totalorder %s24, 1
      %s281 = scalar_select %p280, %s24, 1
      %p282 = scmp.lt.s32.totalorder %s25, 1
      %s283 = scalar_select %p282, %s25, 1
      %s284 = smul.addr %s281, 2
      %s285 = sadd.s32 %s283, %s284
      %s286 = smul.addr %s285, 8
      %s287 = scalar_lea.vmem %s7, %s286
      %p288 = scmp.lt.s32.totalorder %s24, 1
      %s289 = scalar_select %p288, %s24, 1
      %s290 = smul.addr %s289, 20
      %s291 = smul.addr %s290, 2
      %s292 = scalar_lea.vmem %s0, %s291
      %p293 = scmp.lt.s32.totalorder %s24, 1
      %s294 = scalar_select %p293, %s24, 1
      %p295 = scmp.lt.s32.totalorder %s25, 1
      %s296 = scalar_select %p295, %s25, 1
      %s297 = smul.addr %s294, 2
      %s298 = sadd.s32 %s296, %s297
      %s299 = smul.addr %s298, 8
      %s300 = scalar_lea.vmem %s7, %s299
      %s302 = smul.u32 %s25, 8
      %v303 = vld [vmem:[%s1] sm:$0xf]
      %v304 = vld [vmem:[%s1 + $0x4] sm:$0xf]
      %s305 = scalar_lea.vmem %s1, 8
      %v306 = vld [vmem:[%s305] sm:$0xf]
      %v307 = vld [vmem:[%s305 + $0x4] sm:$0xf]
      %s308 = scalar_lea.vmem %s1, 16
      %v309 = vld [vmem:[%s308] sm:$0xf]
      %v310 = vld [vmem:[%s308 + $0x4] sm:$0xf]
      %s311 = scalar_lea.vmem %s1, 24
      %v312 = vld [vmem:[%s311] sm:$0xf]
      %v313 = vld [vmem:[%s311 + $0x4] sm:$0xf]
      %s314 = scalar_lea.vmem %s1, 32
      %v315 = vld [vmem:[%s314] sm:$0xf]
      %v316 = vld [vmem:[%s314 + $0x4] sm:$0xf]
      %s317 = scalar_lea.vmem %s1, 40
      %v318 = vld [vmem:[%s317] sm:$0xf]
      %v319 = vld [vmem:[%s317 + $0x4] sm:$0xf]
      %s320 = scalar_lea.vmem %s1, 48
      %v321 = vld [vmem:[%s320] sm:$0xf]
      %v322 = vld [vmem:[%s320 + $0x4] sm:$0xf]
      %s323 = scalar_lea.vmem %s1, 56
      %v324 = vld [vmem:[%s323] sm:$0xf]
      %v325 = vld [vmem:[%s323 + $0x4] sm:$0xf]
      %s326 = scalar_lea.vmem %s1, 64
      %v327 = vld [vmem:[%s326] sm:$0xf]
      %v328 = vld [vmem:[%s326 + $0x4] sm:$0xf]
      %v329 = vld [vmem:[%s3] sm:$0xf]
      %s330 = scalar_lea.vmem %s3, 4
      %v331 = vld [vmem:[%s330] sm:$0xf]
      %s332 = scalar_lea.vmem %s3, 8
      %v333 = vld [vmem:[%s332] sm:$0xf]
      %s334 = scalar_lea.vmem %s3, 12
      %v335 = vld [vmem:[%s334] sm:$0xf]
      %s336 = scalar_lea.vmem %s3, 16
      %v337 = vld [vmem:[%s336] sm:$0xf]
      %s338 = scalar_lea.vmem %s3, 20
      %v339 = vld [vmem:[%s338] sm:$0xf]
      %s340 = scalar_lea.vmem %s3, 24
      %v341 = vld [vmem:[%s340] sm:$0xf]
      %s342 = scalar_lea.vmem %s3, 28
      %v343 = vld [vmem:[%s342] sm:$0xf]
      %s344 = scalar_lea.vmem %s3, 32
      %v345 = vld [vmem:[%s344] sm:$0xf]
      %v346 = vld [vmem:[%s2] sm:$0xff]
      %v347 = vld [vmem:[%s2 + $0x8] sm:$0xff]
      %v348 = vld [vmem:[%s4] sm:$0xff]
      %v349 = vld [vmem:[%s5] sm:$0xff]
      %v350 = vld [vmem:[#allocation3] sm:$0x1]
      %v351 = vlaneseq
      %v352 = vand.u32 %v351, 127
      %vm353 = vcmp.ge.s32.totalorder %v352, 1
      %vm354 = vcmp.le.s32.totalorder %v352, 16
      %vm355 = vmand %vm353, %vm354
      loop: start=0, step=1, limit=10
      $region49: #{_lambda_.2} parent=47 // loop_pre_header
        _
      $region50: #{_lambda_.2} parent=47 // loop_header
        %s357 = sphi 0, %s361
        %p358 = scmp.ge.s32.totalorder %s357, 10
      $region51: #{_lambda_.2} parent=47 // loop_header_branch
        %360 = sbr.rel (%p358) target = $region55
      $region52: #{_lambda_.2} parent=47 // loop_body
        %s362 = sadd.s32 %s302, %s357
        %s363 = smul.addr %s362, 2
        %s364 = scalar_lea.vmem %s292, %s363
        %v365 = vld [vmem:[%s364] sm:$0x3]
        %v368 = vunpack.c.l.b16 %v306
        %v369 = vunpack.c.l.b16 %v307
        %v370 = vpack.c.b16 %v369, %v368
        %v373 = vunpack.c.l.s4 1983009808
        %v374 = vunpack.c.0.s8 %v373
        %v375 = vlaneseq
        %v376 = vshrl.u32 %v375, 7
        %v377 = vsub.s32 %v374, %v376
        %v378 = vrot.slane %v365, %v377
        %379 = vrot.lane.b32.xlu0 %v378, 127
        %v380 = vpop.permute.xlu0 %379
        %vm381 = vcmask 31744
        %v383 = vsel %vm381, %v370, 0
        %vm385 = vcmask 1041408
        %v387 = vsel %vm385, %v380, 0
        %389 = vmatprep.subr.bf16.mxu0 0
        %390 = vmatpush1.bf16.msra.mxu0 %v387
        %391 = vmatprep.subr.bf16.mxu0 0
        %392 = vmatpush1.bf16.msra.mxu0 0
        %393 = vmatprep.subr.bf16.mxu0 0
        %394 = vmatpush1.bf16.msra.mxu0 0
        %395 = vmatprep.subr.bf16.mxu0 0
        %396 = vmatpush1.bf16.msra.mxu0 0
        %397 = vmatprep.subr.bf16.mxu0 0
        %398 = vmatpush1.bf16.msra.mxu0 0
        %399 = vmatprep.subr.bf16.mxu0 0
        %400 = vmatpush1.bf16.msra.mxu0 0
        %401 = vmatprep.subr.bf16.mxu0 0
        %402 = vmatpush1.bf16.msra.mxu0 0
        %403 = vmatprep.subr.bf16.mxu0 0
        %404 = vmatpush1.bf16.msra.mxu0 0
        %405 = vmatprep.subr.bf16.mxu0 0
        %406 = vmatpush1.bf16.msra.mxu0 0
        %407 = vmatprep.subr.bf16.mxu0 0
        %408 = vmatpush1.bf16.msra.mxu0 0
        %409 = vmatprep.subr.bf16.mxu0 0
        %410 = vmatpush1.bf16.msra.mxu0 0
        %411 = vmatprep.subr.bf16.mxu0 0
        %412 = vmatpush1.bf16.msra.mxu0 0
        %413 = vmatprep.subr.bf16.mxu0 0
        %414 = vmatpush1.bf16.msra.mxu0 0
        %415 = vmatprep.subr.bf16.mxu0 0
        %416 = vmatpush1.bf16.msra.mxu0 0
        %417 = vmatprep.subr.bf16.mxu0 0
        %418 = vmatpush1.bf16.msra.mxu0 0
        %419 = vmatprep.subr.bf16.mxu0 0
        %420 = vmatpush1.bf16.msra.mxu0 0
        %421 = vmatprep.mubr.bf16.mxu0 0
        %422 = vmatmul.mubr.bf16.gmra.mrb[0].mxu0 %v383
        %v423 = vpop.f32.mrb[0].mxu0
        %v424 = vadd.f32 0.0, %v423
        %v425 = vpop.f32.mrb[0].mxu0
        %v426 = vpop.f32.mrb[0].mxu0
        %v427 = vadd.f32 0.0, %v426
        %v428 = vpop.f32.mrb[0].mxu0
        %429 = vdwg.mxu0
        %v432 = vunpack.c.l.b16 %v303
        %v433 = vunpack.c.l.b16 %v304
        %v434 = vpack.c.b16 %v433, %v432
        %v436 = vsel %vm381, %v434, 0
        %v439 = vsel %vm385, %v365, 0
        %441 = vmatprep.subr.bf16.mxu0 0
        %442 = vmatpush1.bf16.msra.mxu0 %v439
        %443 = vmatprep.subr.bf16.mxu0 0
        %444 = vmatpush1.bf16.msra.mxu0 0
        %445 = vmatprep.subr.bf16.mxu0 0
        %446 = vmatpush1.bf16.msra.mxu0 0
        %447 = vmatprep.subr.bf16.mxu0 0
        %448 = vmatpush1.bf16.msra.mxu0 0
        %449 = vmatprep.subr.bf16.mxu0 0
        %450 = vmatpush1.bf16.msra.mxu0 0
        %451 = vmatprep.subr.bf16.mxu0 0
        %452 = vmatpush1.bf16.msra.mxu0 0
        %453 = vmatprep.subr.bf16.mxu0 0
        %454 = vmatpush1.bf16.msra.mxu0 0
        %455 = vmatprep.subr.bf16.mxu0 0
        %456 = vmatpush1.bf16.msra.mxu0 0
        %457 = vmatprep.subr.bf16.mxu0 0
        %458 = vmatpush1.bf16.msra.mxu0 0
        %459 = vmatprep.subr.bf16.mxu0 0
        %460 = vmatpush1.bf16.msra.mxu0 0
        %461 = vmatprep.subr.bf16.mxu0 0
        %462 = vmatpush1.bf16.msra.mxu0 0
        %463 = vmatprep.subr.bf16.mxu0 0
        %464 = vmatpush1.bf16.msra.mxu0 0
        %465 = vmatprep.subr.bf16.mxu0 0
        %466 = vmatpush1.bf16.msra.mxu0 0
        %467 = vmatprep.subr.bf16.mxu0 0
        %468 = vmatpush1.bf16.msra.mxu0 0
        %469 = vmatprep.subr.bf16.mxu0 0
        %470 = vmatpush1.bf16.msra.mxu0 0
        %471 = vmatprep.subr.bf16.mxu0 0
        %472 = vmatpush1.bf16.msra.mxu0 0
        %473 = vmatprep.mubr.bf16.mxu0 0
        %474 = vmatmul.mubr.bf16.gmra.mrb[0].mxu0 %v436
        %v475 = vpop.f32.mrb[0].mxu0
        %v476 = vadd.f32 %v424, %v475
        %v477 = vpop.f32.mrb[0].mxu0
        %v478 = vpop.f32.mrb[0].mxu0
        %v479 = vadd.f32 %v427, %v478
        %v480 = vpop.f32.mrb[0].mxu0
        %481 = vdwg.mxu0
        %v484 = vunpack.c.l.b16 %v309
        %v485 = vunpack.c.l.b16 %v310
        %v486 = vpack.c.b16 %v485, %v484
        %487 = vrot.lane.b32.xlu0 %v378, 126
        %v488 = vpop.permute.xlu0 %487
        %v490 = vsel %vm381, %v486, 0
        %v493 = vsel %vm385, %v488, 0
        %495 = vmatprep.subr.bf16.mxu0 0
        %496 = vmatpush1.bf16.msra.mxu0 %v493
        %497 = vmatprep.subr.bf16.mxu0 0
        %498 = vmatpush1.bf16.msra.mxu0 0
        %499 = vmatprep.subr.bf16.mxu0 0
        %500 = vmatpush1.bf16.msra.mxu0 0
        %501 = vmatprep.subr.bf16.mxu0 0
        %502 = vmatpush1.bf16.msra.mxu0 0
        %503 = vmatprep.subr.bf16.mxu0 0
        %504 = vmatpush1.bf16.msra.mxu0 0
        %505 = vmatprep.subr.bf16.mxu0 0
        %506 = vmatpush1.bf16.msra.mxu0 0
        %507 = vmatprep.subr.bf16.mxu0 0
        %508 = vmatpush1.bf16.msra.mxu0 0
        %509 = vmatprep.subr.bf16.mxu0 0
        %510 = vmatpush1.bf16.msra.mxu0 0
        %511 = vmatprep.subr.bf16.mxu0 0
        %512 = vmatpush1.bf16.msra.mxu0 0
        %513 = vmatprep.subr.bf16.mxu0 0
        %514 = vmatpush1.bf16.msra.mxu0 0
        %515 = vmatprep.subr.bf16.mxu0 0
        %516 = vmatpush1.bf16.msra.mxu0 0
        %517 = vmatprep.subr.bf16.mxu0 0
        %518 = vmatpush1.bf16.msra.mxu0 0
        %519 = vmatprep.subr.bf16.mxu0 0
        %520 = vmatpush1.bf16.msra.mxu0 0
        %521 = vmatprep.subr.bf16.mxu0 0
        %522 = vmatpush1.bf16.msra.mxu0 0
        %523 = vmatprep.subr.bf16.mxu0 0
        %524 = vmatpush1.bf16.msra.mxu0 0
        %525 = vmatprep.subr.bf16.mxu0 0
        %526 = vmatpush1.bf16.msra.mxu0 0
        %527 = vmatprep.mubr.bf16.mxu0 0
        %528 = vmatmul.mubr.bf16.gmra.mrb[0].mxu0 %v490
        %v529 = vpop.f32.mrb[0].mxu0
        %v530 = vadd.f32 0.0, %v529
        %v531 = vpop.f32.mrb[0].mxu0
        %v532 = vpop.f32.mrb[0].mxu0
        %v533 = vadd.f32 0.0, %v532
        %v534 = vpop.f32.mrb[0].mxu0
        %535 = vdwg.mxu0
        %v536 = vadd.f32 %v476, %v530
        %v537 = vadd.f32 %v479, %v533
        %s538 = sadd.s32 %s362, 1
        %s539 = smul.addr %s538, 2
        %s540 = scalar_lea.vmem %s292, %s539
        %v541 = vld [vmem:[%s540] sm:$0x3]
        %v544 = vunpack.c.l.b16 %v312
        %v545 = vunpack.c.l.b16 %v313
        %v546 = vpack.c.b16 %v545, %v544
        %v548 = vsel %vm381, %v546, 0
        %v551 = vsel %vm385, %v541, 0
        %553 = vmatprep.subr.bf16.mxu0 0
        %554 = vmatpush1.bf16.msra.mxu0 %v551
        %555 = vmatprep.subr.bf16.mxu0 0
        %556 = vmatpush1.bf16.msra.mxu0 0
        %557 = vmatprep.subr.bf16.mxu0 0
        %558 = vmatpush1.bf16.msra.mxu0 0
        %559 = vmatprep.subr.bf16.mxu0 0
        %560 = vmatpush1.bf16.msra.mxu0 0
        %561 = vmatprep.subr.bf16.mxu0 0
        %562 = vmatpush1.bf16.msra.mxu0 0
        %563 = vmatprep.subr.bf16.mxu0 0
        %564 = vmatpush1.bf16.msra.mxu0 0
        %565 = vmatprep.subr.bf16.mxu0 0
        %566 = vmatpush1.bf16.msra.mxu0 0
        %567 = vmatprep.subr.bf16.mxu0 0
        %568 = vmatpush1.bf16.msra.mxu0 0
        %569 = vmatprep.subr.bf16.mxu0 0
        %570 = vmatpush1.bf16.msra.mxu0 0
        %571 = vmatprep.subr.bf16.mxu0 0
        %572 = vmatpush1.bf16.msra.mxu0 0
        %573 = vmatprep.subr.bf16.mxu0 0
        %574 = vmatpush1.bf16.msra.mxu0 0
        %575 = vmatprep.subr.bf16.mxu0 0
        %576 = vmatpush1.bf16.msra.mxu0 0
        %577 = vmatprep.subr.bf16.mxu0 0
        %578 = vmatpush1.bf16.msra.mxu0 0
        %579 = vmatprep.subr.bf16.mxu0 0
        %580 = vmatpush1.bf16.msra.mxu0 0
        %581 = vmatprep.subr.bf16.mxu0 0
        %582 = vmatpush1.bf16.msra.mxu0 0
        %583 = vmatprep.subr.bf16.mxu0 0
        %584 = vmatpush1.bf16.msra.mxu0 0
        %585 = vmatprep.mubr.bf16.mxu0 0
        %586 = vmatmul.mubr.bf16.gmra.mrb[0].mxu0 %v548
        %v587 = vpop.f32.mrb[0].mxu0
        %v588 = vadd.f32 0.0, %v587
        %v589 = vpop.f32.mrb[0].mxu0
        %v590 = vpop.f32.mrb[0].mxu0
        %v591 = vadd.f32 0.0, %v590
        %v592 = vpop.f32.mrb[0].mxu0
        %593 = vdwg.mxu0
        %v594 = vadd.f32 %v536, %v588
        %v595 = vadd.f32 %v537, %v591
        %v598 = vunpack.c.l.b16 %v315
        %v599 = vunpack.c.l.b16 %v316
        %v600 = vpack.c.b16 %v599, %v598
        %v603 = vunpack.c.l.s4 1983009808
        %v604 = vunpack.c.0.s8 %v603
        %v605 = vlaneseq
        %v606 = vshrl.u32 %v605, 7
        %v607 = vsub.s32 %v604, %v606
        %v608 = vrot.slane %v541, %v607
        %609 = vrot.lane.b32.xlu0 %v608, 127
        %v610 = vpop.permute.xlu0 %609
        %v612 = vsel %vm381, %v600, 0
        %v615 = vsel %vm385, %v610, 0
        %617 = vmatprep.subr.bf16.mxu0 0
        %618 = vmatpush1.bf16.msra.mxu0 %v615
        %619 = vmatprep.subr.bf16.mxu0 0
        %620 = vmatpush1.bf16.msra.mxu0 0
        %621 = vmatprep.subr.bf16.mxu0 0
        %622 = vmatpush1.bf16.msra.mxu0 0
        %623 = vmatprep.subr.bf16.mxu0 0
        %624 = vmatpush1.bf16.msra.mxu0 0
        %625 = vmatprep.subr.bf16.mxu0 0
        %626 = vmatpush1.bf16.msra.mxu0 0
        %627 = vmatprep.subr.bf16.mxu0 0
        %628 = vmatpush1.bf16.msra.mxu0 0
        %629 = vmatprep.subr.bf16.mxu0 0
        %630 = vmatpush1.bf16.msra.mxu0 0
        %631 = vmatprep.subr.bf16.mxu0 0
        %632 = vmatpush1.bf16.msra.mxu0 0
        %633 = vmatprep.subr.bf16.mxu0 0
        %634 = vmatpush1.bf16.msra.mxu0 0
        %635 = vmatprep.subr.bf16.mxu0 0
        %636 = vmatpush1.bf16.msra.mxu0 0
        %637 = vmatprep.subr.bf16.mxu0 0
        %638 = vmatpush1.bf16.msra.mxu0 0
        %639 = vmatprep.subr.bf16.mxu0 0
        %640 = vmatpush1.bf16.msra.mxu0 0
        %641 = vmatprep.subr.bf16.mxu0 0
        %642 = vmatpush1.bf16.msra.mxu0 0
        %643 = vmatprep.subr.bf16.mxu0 0
        %644 = vmatpush1.bf16.msra.mxu0 0
        %645 = vmatprep.subr.bf16.mxu0 0
        %646 = vmatpush1.bf16.msra.mxu0 0
        %647 = vmatprep.subr.bf16.mxu0 0
        %648 = vmatpush1.bf16.msra.mxu0 0
        %649 = vmatprep.mubr.bf16.mxu0 0
        %650 = vmatmul.mubr.bf16.gmra.mrb[0].mxu0 %v612
        %v651 = vpop.f32.mrb[0].mxu0
        %v652 = vadd.f32 0.0, %v651
        %v653 = vpop.f32.mrb[0].mxu0
        %v654 = vpop.f32.mrb[0].mxu0
        %v655 = vadd.f32 0.0, %v654
        %v656 = vpop.f32.mrb[0].mxu0
        %657 = vdwg.mxu0
        %v658 = vadd.f32 %v594, %v652
        %v659 = vadd.f32 %v595, %v655
        %v662 = vunpack.c.l.b16 %v318
        %v663 = vunpack.c.l.b16 %v319
        %v664 = vpack.c.b16 %v663, %v662
        %665 = vrot.lane.b32.xlu0 %v608, 126
        %v666 = vpop.permute.xlu0 %665
        %v668 = vsel %vm381, %v664, 0
        %v671 = vsel %vm385, %v666, 0
        %673 = vmatprep.subr.bf16.mxu0 0
        %674 = vmatpush1.bf16.msra.mxu0 %v671
        %675 = vmatprep.subr.bf16.mxu0 0
        %676 = vmatpush1.bf16.msra.mxu0 0
        %677 = vmatprep.subr.bf16.mxu0 0
        %678 = vmatpush1.bf16.msra.mxu0 0
        %679 = vmatprep.subr.bf16.mxu0 0
        %680 = vmatpush1.bf16.msra.mxu0 0
        %681 = vmatprep.subr.bf16.mxu0 0
        %682 = vmatpush1.bf16.msra.mxu0 0
        %683 = vmatprep.subr.bf16.mxu0 0
        %684 = vmatpush1.bf16.msra.mxu0 0
        %685 = vmatprep.subr.bf16.mxu0 0
        %686 = vmatpush1.bf16.msra.mxu0 0
        %687 = vmatprep.subr.bf16.mxu0 0
        %688 = vmatpush1.bf16.msra.mxu0 0
        %689 = vmatprep.subr.bf16.mxu0 0
        %690 = vmatpush1.bf16.msra.mxu0 0
        %691 = vmatprep.subr.bf16.mxu0 0
        %692 = vmatpush1.bf16.msra.mxu0 0
        %693 = vmatprep.subr.bf16.mxu0 0
        %694 = vmatpush1.bf16.msra.mxu0 0
        %695 = vmatprep.subr.bf16.mxu0 0
        %696 = vmatpush1.bf16.msra.mxu0 0
        %697 = vmatprep.subr.bf16.mxu0 0
        %698 = vmatpush1.bf16.msra.mxu0 0
        %699 = vmatprep.subr.bf16.mxu0 0
        %700 = vmatpush1.bf16.msra.mxu0 0
        %701 = vmatprep.subr.bf16.mxu0 0
        %702 = vmatpush1.bf16.msra.mxu0 0
        %703 = vmatprep.subr.bf16.mxu0 0
        %704 = vmatpush1.bf16.msra.mxu0 0
        %705 = vmatprep.mubr.bf16.mxu0 0
        %706 = vmatmul.mubr.bf16.gmra.mrb[0].mxu0 %v668
        %v707 = vpop.f32.mrb[0].mxu0
        %v708 = vadd.f32 0.0, %v707
        %v709 = vpop.f32.mrb[0].mxu0
        %v710 = vpop.f32.mrb[0].mxu0
        %v711 = vadd.f32 0.0, %v710
        %v712 = vpop.f32.mrb[0].mxu0
        %713 = vdwg.mxu0
        %v714 = vadd.f32 %v658, %v708
        %v715 = vadd.f32 %v659, %v711
        %s716 = sadd.s32 %s362, 2
        %s717 = smul.addr %s716, 2
        %s718 = scalar_lea.vmem %s292, %s717
        %v719 = vld [vmem:[%s718] sm:$0x3]
        %v722 = vunpack.c.l.b16 %v321
        %v723 = vunpack.c.l.b16 %v322
        %v724 = vpack.c.b16 %v723, %v722
        %v726 = vsel %vm381, %v724, 0
        %v729 = vsel %vm385, %v719, 0
        %731 = vmatprep.subr.bf16.mxu0 0
        %732 = vmatpush1.bf16.msra.mxu0 %v729
        %733 = vmatprep.subr.bf16.mxu0 0
        %734 = vmatpush1.bf16.msra.mxu0 0
        %735 = vmatprep.subr.bf16.mxu0 0
        %736 = vmatpush1.bf16.msra.mxu0 0
        %737 = vmatprep.subr.bf16.mxu0 0
        %738 = vmatpush1.bf16.msra.mxu0 0
        %739 = vmatprep.subr.bf16.mxu0 0
        %740 = vmatpush1.bf16.msra.mxu0 0
        %741 = vmatprep.subr.bf16.mxu0 0
        %742 = vmatpush1.bf16.msra.mxu0 0
        %743 = vmatprep.subr.bf16.mxu0 0
        %744 = vmatpush1.bf16.msra.mxu0 0
        %745 = vmatprep.subr.bf16.mxu0 0
        %746 = vmatpush1.bf16.msra.mxu0 0
        %747 = vmatprep.subr.bf16.mxu0 0
        %748 = vmatpush1.bf16.msra.mxu0 0
        %749 = vmatprep.subr.bf16.mxu0 0
        %750 = vmatpush1.bf16.msra.mxu0 0
        %751 = vmatprep.subr.bf16.mxu0 0
        %752 = vmatpush1.bf16.msra.mxu0 0
        %753 = vmatprep.subr.bf16.mxu0 0
        %754 = vmatpush1.bf16.msra.mxu0 0
        %755 = vmatprep.subr.bf16.mxu0 0
        %756 = vmatpush1.bf16.msra.mxu0 0
        %757 = vmatprep.subr.bf16.mxu0 0
        %758 = vmatpush1.bf16.msra.mxu0 0
        %759 = vmatprep.subr.bf16.mxu0 0
        %760 = vmatpush1.bf16.msra.mxu0 0
        %761 = vmatprep.subr.bf16.mxu0 0
        %762 = vmatpush1.bf16.msra.mxu0 0
        %763 = vmatprep.mubr.bf16.mxu0 0
        %764 = vmatmul.mubr.bf16.gmra.mrb[0].mxu0 %v726
        %v765 = vpop.f32.mrb[0].mxu0
        %v766 = vadd.f32 0.0, %v765
        %v767 = vpop.f32.mrb[0].mxu0
        %v768 = vpop.f32.mrb[0].mxu0
        %v769 = vadd.f32 0.0, %v768
        %v770 = vpop.f32.mrb[0].mxu0
        %771 = vdwg.mxu0
        %v772 = vadd.f32 %v714, %v766
        %v773 = vadd.f32 %v715, %v769
        %v776 = vunpack.c.l.b16 %v324
        %v777 = vunpack.c.l.b16 %v325
        %v778 = vpack.c.b16 %v777, %v776
        %v781 = vunpack.c.l.s4 1983009808
        %v782 = vunpack.c.0.s8 %v781
        %v783 = vlaneseq
        %v784 = vshrl.u32 %v783, 7
        %v785 = vsub.s32 %v782, %v784
        %v786 = vrot.slane %v719, %v785
        %787 = vrot.lane.b32.xlu0 %v786, 127
        %v788 = vpop.permute.xlu0 %787
        %v790 = vsel %vm381, %v778, 0
        %v793 = vsel %vm385, %v788, 0
        %795 = vmatprep.subr.bf16.mxu0 0
        %796 = vmatpush1.bf16.msra.mxu0 %v793
        %797 = vmatprep.subr.bf16.mxu0 0
        %798 = vmatpush1.bf16.msra.mxu0 0
        %799 = vmatprep.subr.bf16.mxu0 0
        %800 = vmatpush1.bf16.msra.mxu0 0
        %801 = vmatprep.subr.bf16.mxu0 0
        %802 = vmatpush1.bf16.msra.mxu0 0
        %803 = vmatprep.subr.bf16.mxu0 0
        %804 = vmatpush1.bf16.msra.mxu0 0
        %805 = vmatprep.subr.bf16.mxu0 0
        %806 = vmatpush1.bf16.msra.mxu0 0
        %807 = vmatprep.subr.bf16.mxu0 0
        %808 = vmatpush1.bf16.msra.mxu0 0
        %809 = vmatprep.subr.bf16.mxu0 0
        %810 = vmatpush1.bf16.msra.mxu0 0
        %811 = vmatprep.subr.bf16.mxu0 0
        %812 = vmatpush1.bf16.msra.mxu0 0
        %813 = vmatprep.subr.bf16.mxu0 0
        %814 = vmatpush1.bf16.msra.mxu0 0
        %815 = vmatprep.subr.bf16.mxu0 0
        %816 = vmatpush1.bf16.msra.mxu0 0
        %817 = vmatprep.subr.bf16.mxu0 0
        %818 = vmatpush1.bf16.msra.mxu0 0
        %819 = vmatprep.subr.bf16.mxu0 0
        %820 = vmatpush1.bf16.msra.mxu0 0
        %821 = vmatprep.subr.bf16.mxu0 0
        %822 = vmatpush1.bf16.msra.mxu0 0
        %823 = vmatprep.subr.bf16.mxu0 0
        %824 = vmatpush1.bf16.msra.mxu0 0
        %825 = vmatprep.subr.bf16.mxu0 0
        %826 = vmatpush1.bf16.msra.mxu0 0
        %827 = vmatprep.mubr.bf16.mxu0 0
        %828 = vmatmul.mubr.bf16.gmra.mrb[0].mxu0 %v790
        %v829 = vpop.f32.mrb[0].mxu0
        %v830 = vadd.f32 0.0, %v829
        %v831 = vpop.f32.mrb[0].mxu0
        %v832 = vpop.f32.mrb[0].mxu0
        %v833 = vadd.f32 0.0, %v832
        %v834 = vpop.f32.mrb[0].mxu0
        %835 = vdwg.mxu0
        %v836 = vadd.f32 %v772, %v830
        %v837 = vadd.f32 %v773, %v833
        %v840 = vunpack.c.l.b16 %v327
        %v841 = vunpack.c.l.b16 %v328
        %v842 = vpack.c.b16 %v841, %v840
        %843 = vrot.lane.b32.xlu0 %v786, 126
        %v844 = vpop.permute.xlu0 %843
        %v846 = vsel %vm381, %v842, 0
        %v849 = vsel %vm385, %v844, 0
        %851 = vmatprep.subr.bf16.mxu0 0
        %852 = vmatpush1.bf16.msra.mxu0 %v849
        %853 = vmatprep.subr.bf16.mxu0 0
        %854 = vmatpush1.bf16.msra.mxu0 0
        %855 = vmatprep.subr.bf16.mxu0 0
        %856 = vmatpush1.bf16.msra.mxu0 0
        %857 = vmatprep.subr.bf16.mxu0 0
        %858 = vmatpush1.bf16.msra.mxu0 0
        %859 = vmatprep.subr.bf16.mxu0 0
        %860 = vmatpush1.bf16.msra.mxu0 0
        %861 = vmatprep.subr.bf16.mxu0 0
        %862 = vmatpush1.bf16.msra.mxu0 0
        %863 = vmatprep.subr.bf16.mxu0 0
        %864 = vmatpush1.bf16.msra.mxu0 0
        %865 = vmatprep.subr.bf16.mxu0 0
        %866 = vmatpush1.bf16.msra.mxu0 0
        %867 = vmatprep.subr.bf16.mxu0 0
        %868 = vmatpush1.bf16.msra.mxu0 0
        %869 = vmatprep.subr.bf16.mxu0 0
        %870 = vmatpush1.bf16.msra.mxu0 0
        %871 = vmatprep.subr.bf16.mxu0 0
        %872 = vmatpush1.bf16.msra.mxu0 0
        %873 = vmatprep.subr.bf16.mxu0 0
        %874 = vmatpush1.bf16.msra.mxu0 0
        %875 = vmatprep.subr.bf16.mxu0 0
        %876 = vmatpush1.bf16.msra.mxu0 0
        %877 = vmatprep.subr.bf16.mxu0 0
        %878 = vmatpush1.bf16.msra.mxu0 0
        %879 = vmatprep.subr.bf16.mxu0 0
        %880 = vmatpush1.bf16.msra.mxu0 0
        %881 = vmatprep.subr.bf16.mxu0 0
        %882 = vmatpush1.bf16.msra.mxu0 0
        %883 = vmatprep.mubr.bf16.mxu0 0
        %884 = vmatmul.mubr.bf16.gmra.mrb[0].mxu0 %v846
        %v885 = vpop.f32.mrb[0].mxu0
        %v886 = vadd.f32 0.0, %v885
        %v887 = vpop.f32.mrb[0].mxu0
        %v888 = vpop.f32.mrb[0].mxu0
        %v889 = vadd.f32 0.0, %v888
        %v890 = vpop.f32.mrb[0].mxu0
        %891 = vdwg.mxu0
        %v892 = vadd.f32 %v836, %v886
        %v893 = vadd.f32 %v837, %v889
        %895 = vset.pattern.permute.xlu0 0
        %896 = vperm.xlu0 %895, %v346
        %v897 = vpop.permute.xlu0 %896
        %900 = vset.pattern.permute.xlu0 0
        %901 = vperm.xlu0 %900, %v347
        %v902 = vpop.permute.xlu0 %901
        %v904 = vadd.f32 %v892, %v897
        %v905 = vadd.f32 %v893, %v902
        %v906 = vmax.f32 %v904, 0.0
        %v907 = vmax.f32 %v905, 0.0
        %p908 = scmp.ge.s32.totalorder %s362, 1
        %p909 = scmp.le.s32.totalorder %s362, 16
        %p910 = pnand %p908, %p909
        %p911 = pneg %p910
        %s912 = scalar_select %p911, 1, 0
        %v913 = vstv %s912
        %vm914 = vcmp.eq.s32.totalorder %v913, 1
        %vm915 = vmand %vm355, %vm914
        %v916 = vsel %vm915, %v906, 0.0
        %v917 = vsel %vm915, %v907, 0.0
        %v918 = vpack.c.bf16 %v917, %v916
        %s919 = smul.addr %s357, 8
        %s920 = scalar_lea.vmem [#allocation2], %s919
        %vm921 = vcmask 146432
        %922 = vst.msk [vmem:[%s920] sm:$0xff] %vm921, %v918
      $region53: #{_lambda_.2} parent=47 // loop_footer
        %s361 = sadd.s32 1, %s357
      $region54: #{_lambda_.2} parent=47 // loop_footer_branch
        %356 = sbr.rel target = $region50
      $region55: #{_lambda_.2} parent=47 // loop_exit
        _
      loop: start=0, step=1, limit=8
      $region56: #{_lambda_.2} parent=47 // loop_pre_header
        _
      $region57: #{_lambda_.2} parent=47 // loop_header
        %s924 = sphi 0, %s928
        %p925 = scmp.ge.s32.totalorder %s924, 8
      $region58: #{_lambda_.2} parent=47 // loop_header_branch
        %927 = sbr.rel (%p925) target = $region62
      $region59: #{_lambda_.2} parent=47 // loop_body
        %s929 = smul.addr %s924, 8
        %s930 = scalar_lea.vmem [#allocation2], %s929
        %v931 = vld [vmem:[%s930] sm:$0xff]
        %933 = vrot.lane.b32.xlu0 %v931, 127
        %v934 = vpop.permute.xlu0 %933
        %vm936 = vcmask 130048
        %v938 = vsel %vm936, %v331, 0
        %940 = vmatprep.subr.bf16.mxu0 0
        %941 = vmatpush1.bf16.msra.mxu0 %v934
        %942 = vmatprep.subr.bf16.mxu0 0
        %943 = vmatpush1.bf16.msra.mxu0 0
        %944 = vmatprep.subr.bf16.mxu0 0
        %945 = vmatpush1.bf16.msra.mxu0 0
        %946 = vmatprep.subr.bf16.mxu0 0
        %947 = vmatpush1.bf16.msra.mxu0 0
        %948 = vmatprep.subr.bf16.mxu0 0
        %949 = vmatpush1.bf16.msra.mxu0 0
        %950 = vmatprep.subr.bf16.mxu0 0
        %951 = vmatpush1.bf16.msra.mxu0 0
        %952 = vmatprep.subr.bf16.mxu0 0
        %953 = vmatpush1.bf16.msra.mxu0 0
        %954 = vmatprep.subr.bf16.mxu0 0
        %955 = vmatpush1.bf16.msra.mxu0 0
        %956 = vmatprep.subr.bf16.mxu0 0
        %957 = vmatpush1.bf16.msra.mxu0 0
        %958 = vmatprep.subr.bf16.mxu0 0
        %959 = vmatpush1.bf16.msra.mxu0 0
        %960 = vmatprep.subr.bf16.mxu0 0
        %961 = vmatpush1.bf16.msra.mxu0 0
        %962 = vmatprep.subr.bf16.mxu0 0
        %963 = vmatpush1.bf16.msra.mxu0 0
        %964 = vmatprep.subr.bf16.mxu0 0
        %965 = vmatpush1.bf16.msra.mxu0 0
        %966 = vmatprep.subr.bf16.mxu0 0
        %967 = vmatpush1.bf16.msra.mxu0 0
        %968 = vmatprep.subr.bf16.mxu0 0
        %969 = vmatpush1.bf16.msra.mxu0 0
        %970 = vmatprep.subr.bf16.mxu0 0
        %971 = vmatpush1.bf16.msra.mxu0 0
        %972 = vmatprep.mubr.bf16.mxu0 0
        %973 = vmatmul.mubr.bf16.gmra.mrb[0].mxu0 %v938
        %v974 = vpop.f32.mrb[0].mxu0
        %v975 = vadd.f32 0.0, %v974
        %v976 = vpop.f32.mrb[0].mxu0
        %v977 = vpop.f32.mrb[0].mxu0
        %v978 = vpop.f32.mrb[0].mxu0
        %979 = vdwg.mxu0
        %v981 = vsel %vm936, %v329, 0
        %983 = vmatprep.subr.bf16.mxu0 0
        %984 = vmatpush1.bf16.msra.mxu0 %v931
        %985 = vmatprep.subr.bf16.mxu0 0
        %986 = vmatpush1.bf16.msra.mxu0 0
        %987 = vmatprep.subr.bf16.mxu0 0
        %988 = vmatpush1.bf16.msra.mxu0 0
        %989 = vmatprep.subr.bf16.mxu0 0
        %990 = vmatpush1.bf16.msra.mxu0 0
        %991 = vmatprep.subr.bf16.mxu0 0
        %992 = vmatpush1.bf16.msra.mxu0 0
        %993 = vmatprep.subr.bf16.mxu0 0
        %994 = vmatpush1.bf16.msra.mxu0 0
        %995 = vmatprep.subr.bf16.mxu0 0
        %996 = vmatpush1.bf16.msra.mxu0 0
        %997 = vmatprep.subr.bf16.mxu0 0
        %998 = vmatpush1.bf16.msra.mxu0 0
        %999 = vmatprep.subr.bf16.mxu0 0
        %1000 = vmatpush1.bf16.msra.mxu0 0
        %1001 = vmatprep.subr.bf16.mxu0 0
        %1002 = vmatpush1.bf16.msra.mxu0 0
        %1003 = vmatprep.subr.bf16.mxu0 0
        %1004 = vmatpush1.bf16.msra.mxu0 0
        %1005 = vmatprep.subr.bf16.mxu0 0
        %1006 = vmatpush1.bf16.msra.mxu0 0
        %1007 = vmatprep.subr.bf16.mxu0 0
        %1008 = vmatpush1.bf16.msra.mxu0 0
        %1009 = vmatprep.subr.bf16.mxu0 0
        %1010 = vmatpush1.bf16.msra.mxu0 0
        %1011 = vmatprep.subr.bf16.mxu0 0
        %1012 = vmatpush1.bf16.msra.mxu0 0
        %1013 = vmatprep.subr.bf16.mxu0 0
        %1014 = vmatpush1.bf16.msra.mxu0 0
        %1015 = vmatprep.mubr.bf16.mxu0 0
        %1016 = vmatmul.mubr.bf16.gmra.mrb[0].mxu0 %v981
        %v1017 = vpop.f32.mrb[0].mxu0
        %v1018 = vadd.f32 %v975, %v1017
        %v1019 = vpop.f32.mrb[0].mxu0
        %v1020 = vpop.f32.mrb[0].mxu0
        %v1021 = vpop.f32.mrb[0].mxu0
        %1022 = vdwg.mxu0
        %1023 = vrot.lane.b32.xlu0 %v931, 126
        %v1024 = vpop.permute.xlu0 %1023
        %v1027 = vsel %vm936, %v333, 0
        %1029 = vmatprep.subr.bf16.mxu0 0
        %1030 = vmatpush1.bf16.msra.mxu0 %v1024
        %1031 = vmatprep.subr.bf16.mxu0 0
        %1032 = vmatpush1.bf16.msra.mxu0 0
        %1033 = vmatprep.subr.bf16.mxu0 0
        %1034 = vmatpush1.bf16.msra.mxu0 0
        %1035 = vmatprep.subr.bf16.mxu0 0
        %1036 = vmatpush1.bf16.msra.mxu0 0
        %1037 = vmatprep.subr.bf16.mxu0 0
        %1038 = vmatpush1.bf16.msra.mxu0 0
        %1039 = vmatprep.subr.bf16.mxu0 0
        %1040 = vmatpush1.bf16.msra.mxu0 0
        %1041 = vmatprep.subr.bf16.mxu0 0
        %1042 = vmatpush1.bf16.msra.mxu0 0
        %1043 = vmatprep.subr.bf16.mxu0 0
        %1044 = vmatpush1.bf16.msra.mxu0 0
        %1045 = vmatprep.subr.bf16.mxu0 0
        %1046 = vmatpush1.bf16.msra.mxu0 0
        %1047 = vmatprep.subr.bf16.mxu0 0
        %1048 = vmatpush1.bf16.msra.mxu0 0
        %1049 = vmatprep.subr.bf16.mxu0 0
        %1050 = vmatpush1.bf16.msra.mxu0 0
        %1051 = vmatprep.subr.bf16.mxu0 0
        %1052 = vmatpush1.bf16.msra.mxu0 0
        %1053 = vmatprep.subr.bf16.mxu0 0
        %1054 = vmatpush1.bf16.msra.mxu0 0
        %1055 = vmatprep.subr.bf16.mxu0 0
        %1056 = vmatpush1.bf16.msra.mxu0 0
        %1057 = vmatprep.subr.bf16.mxu0 0
        %1058 = vmatpush1.bf16.msra.mxu0 0
        %1059 = vmatprep.subr.bf16.mxu0 0
        %1060 = vmatpush1.bf16.msra.mxu0 0
        %1061 = vmatprep.mubr.bf16.mxu0 0
        %1062 = vmatmul.mubr.bf16.gmra.mrb[0].mxu0 %v1027
        %v1063 = vpop.f32.mrb[0].mxu0
        %v1064 = vadd.f32 0.0, %v1063
        %v1065 = vpop.f32.mrb[0].mxu0
        %v1066 = vpop.f32.mrb[0].mxu0
        %v1067 = vpop.f32.mrb[0].mxu0
        %1068 = vdwg.mxu0
        %v1069 = vadd.f32 %v1018, %v1064
        %s1070 = sadd.s32 %s924, 1
        %s1071 = smul.addr %s1070, 8
        %s1072 = scalar_lea.vmem [#allocation2], %s1071
        %v1073 = vld [vmem:[%s1072] sm:$0xff]
        %v1075 = vsel %vm936, %v335, 0
        %1077 = vmatprep.subr.bf16.mxu0 0
        %1078 = vmatpush1.bf16.msra.mxu0 %v1073
        %1079 = vmatprep.subr.bf16.mxu0 0
        %1080 = vmatpush1.bf16.msra.mxu0 0
        %1081 = vmatprep.subr.bf16.mxu0 0
        %1082 = vmatpush1.bf16.msra.mxu0 0
        %1083 = vmatprep.subr.bf16.mxu0 0
        %1084 = vmatpush1.bf16.msra.mxu0 0
        %1085 = vmatprep.subr.bf16.mxu0 0
        %1086 = vmatpush1.bf16.msra.mxu0 0
        %1087 = vmatprep.subr.bf16.mxu0 0
        %1088 = vmatpush1.bf16.msra.mxu0 0
        %1089 = vmatprep.subr.bf16.mxu0 0
        %1090 = vmatpush1.bf16.msra.mxu0 0
        %1091 = vmatprep.subr.bf16.mxu0 0
        %1092 = vmatpush1.bf16.msra.mxu0 0
        %1093 = vmatprep.subr.bf16.mxu0 0
        %1094 = vmatpush1.bf16.msra.mxu0 0
        %1095 = vmatprep.subr.bf16.mxu0 0
        %1096 = vmatpush1.bf16.msra.mxu0 0
        %1097 = vmatprep.subr.bf16.mxu0 0
        %1098 = vmatpush1.bf16.msra.mxu0 0
        %1099 = vmatprep.subr.bf16.mxu0 0
        %1100 = vmatpush1.bf16.msra.mxu0 0
        %1101 = vmatprep.subr.bf16.mxu0 0
        %1102 = vmatpush1.bf16.msra.mxu0 0
        %1103 = vmatprep.subr.bf16.mxu0 0
        %1104 = vmatpush1.bf16.msra.mxu0 0
        %1105 = vmatprep.subr.bf16.mxu0 0
        %1106 = vmatpush1.bf16.msra.mxu0 0
        %1107 = vmatprep.subr.bf16.mxu0 0
        %1108 = vmatpush1.bf16.msra.mxu0 0
        %1109 = vmatprep.mubr.bf16.mxu0 0
        %1110 = vmatmul.mubr.bf16.gmra.mrb[0].mxu0 %v1075
        %v1111 = vpop.f32.mrb[0].mxu0
        %v1112 = vadd.f32 0.0, %v1111
        %v1113 = vpop.f32.mrb[0].mxu0
        %v1114 = vpop.f32.mrb[0].mxu0
        %v1115 = vpop.f32.mrb[0].mxu0
        %1116 = vdwg.mxu0
        %v1117 = vadd.f32 %v1069, %v1112
        %1119 = vrot.lane.b32.xlu0 %v1073, 127
        %v1120 = vpop.permute.xlu0 %1119
        %v1123 = vsel %vm936, %v337, 0
        %1125 = vmatprep.subr.bf16.mxu0 0
        %1126 = vmatpush1.bf16.msra.mxu0 %v1120
        %1127 = vmatprep.subr.bf16.mxu0 0
        %1128 = vmatpush1.bf16.msra.mxu0 0
        %1129 = vmatprep.subr.bf16.mxu0 0
        %1130 = vmatpush1.bf16.msra.mxu0 0
        %1131 = vmatprep.subr.bf16.mxu0 0
        %1132 = vmatpush1.bf16.msra.mxu0 0
        %1133 = vmatprep.subr.bf16.mxu0 0
        %1134 = vmatpush1.bf16.msra.mxu0 0
        %1135 = vmatprep.subr.bf16.mxu0 0
        %1136 = vmatpush1.bf16.msra.mxu0 0
        %1137 = vmatprep.subr.bf16.mxu0 0
        %1138 = vmatpush1.bf16.msra.mxu0 0
        %1139 = vmatprep.subr.bf16.mxu0 0
        %1140 = vmatpush1.bf16.msra.mxu0 0
        %1141 = vmatprep.subr.bf16.mxu0 0
        %1142 = vmatpush1.bf16.msra.mxu0 0
        %1143 = vmatprep.subr.bf16.mxu0 0
        %1144 = vmatpush1.bf16.msra.mxu0 0
        %1145 = vmatprep.subr.bf16.mxu0 0
        %1146 = vmatpush1.bf16.msra.mxu0 0
        %1147 = vmatprep.subr.bf16.mxu0 0
        %1148 = vmatpush1.bf16.msra.mxu0 0
        %1149 = vmatprep.subr.bf16.mxu0 0
        %1150 = vmatpush1.bf16.msra.mxu0 0
        %1151 = vmatprep.subr.bf16.mxu0 0
        %1152 = vmatpush1.bf16.msra.mxu0 0
        %1153 = vmatprep.subr.bf16.mxu0 0
        %1154 = vmatpush1.bf16.msra.mxu0 0
        %1155 = vmatprep.subr.bf16.mxu0 0
        %1156 = vmatpush1.bf16.msra.mxu0 0
        %1157 = vmatprep.mubr.bf16.mxu0 0
        %1158 = vmatmul.mubr.bf16.gmra.mrb[0].mxu0 %v1123
        %v1159 = vpop.f32.mrb[0].mxu0
        %v1160 = vadd.f32 0.0, %v1159
        %v1161 = vpop.f32.mrb[0].mxu0
        %v1162 = vpop.f32.mrb[0].mxu0
        %v1163 = vpop.f32.mrb[0].mxu0
        %1164 = vdwg.mxu0
        %v1165 = vadd.f32 %v1117, %v1160
        %1166 = vrot.lane.b32.xlu0 %v1073, 126
        %v1167 = vpop.permute.xlu0 %1166
        %v1170 = vsel %vm936, %v339, 0
        %1172 = vmatprep.subr.bf16.mxu0 0
        %1173 = vmatpush1.bf16.msra.mxu0 %v1167
        %1174 = vmatprep.subr.bf16.mxu0 0
        %1175 = vmatpush1.bf16.msra.mxu0 0
        %1176 = vmatprep.subr.bf16.mxu0 0
        %1177 = vmatpush1.bf16.msra.mxu0 0
        %1178 = vmatprep.subr.bf16.mxu0 0
        %1179 = vmatpush1.bf16.msra.mxu0 0
        %1180 = vmatprep.subr.bf16.mxu0 0
        %1181 = vmatpush1.bf16.msra.mxu0 0
        %1182 = vmatprep.subr.bf16.mxu0 0
        %1183 = vmatpush1.bf16.msra.mxu0 0
        %1184 = vmatprep.subr.bf16.mxu0 0
        %1185 = vmatpush1.bf16.msra.mxu0 0
        %1186 = vmatprep.subr.bf16.mxu0 0
        %1187 = vmatpush1.bf16.msra.mxu0 0
        %1188 = vmatprep.subr.bf16.mxu0 0
        %1189 = vmatpush1.bf16.msra.mxu0 0
        %1190 = vmatprep.subr.bf16.mxu0 0
        %1191 = vmatpush1.bf16.msra.mxu0 0
        %1192 = vmatprep.subr.bf16.mxu0 0
        %1193 = vmatpush1.bf16.msra.mxu0 0
        %1194 = vmatprep.subr.bf16.mxu0 0
        %1195 = vmatpush1.bf16.msra.mxu0 0
        %1196 = vmatprep.subr.bf16.mxu0 0
        %1197 = vmatpush1.bf16.msra.mxu0 0
        %1198 = vmatprep.subr.bf16.mxu0 0
        %1199 = vmatpush1.bf16.msra.mxu0 0
        %1200 = vmatprep.subr.bf16.mxu0 0
        %1201 = vmatpush1.bf16.msra.mxu0 0
        %1202 = vmatprep.subr.bf16.mxu0 0
        %1203 = vmatpush1.bf16.msra.mxu0 0
        %1204 = vmatprep.mubr.bf16.mxu0 0
        %1205 = vmatmul.mubr.bf16.gmra.mrb[0].mxu0 %v1170
        %v1206 = vpop.f32.mrb[0].mxu0
        %v1207 = vadd.f32 0.0, %v1206
        %v1208 = vpop.f32.mrb[0].mxu0
        %v1209 = vpop.f32.mrb[0].mxu0
        %v1210 = vpop.f32.mrb[0].mxu0
        %1211 = vdwg.mxu0
        %v1212 = vadd.f32 %v1165, %v1207
        %s1213 = sadd.s32 %s924, 2
        %s1214 = smul.addr %s1213, 8
        %s1215 = scalar_lea.vmem [#allocation2], %s1214
        %v1216 = vld [vmem:[%s1215] sm:$0xff]
        %v1218 = vsel %vm936, %v341, 0
        %1220 = vmatprep.subr.bf16.mxu0 0
        %1221 = vmatpush1.bf16.msra.mxu0 %v1216
        %1222 = vmatprep.subr.bf16.mxu0 0
        %1223 = vmatpush1.bf16.msra.mxu0 0
        %1224 = vmatprep.subr.bf16.mxu0 0
        %1225 = vmatpush1.bf16.msra.mxu0 0
        %1226 = vmatprep.subr.bf16.mxu0 0
        %1227 = vmatpush1.bf16.msra.mxu0 0
        %1228 = vmatprep.subr.bf16.mxu0 0
        %1229 = vmatpush1.bf16.msra.mxu0 0
        %1230 = vmatprep.subr.bf16.mxu0 0
        %1231 = vmatpush1.bf16.msra.mxu0 0
        %1232 = vmatprep.subr.bf16.mxu0 0
        %1233 = vmatpush1.bf16.msra.mxu0 0
        %1234 = vmatprep.subr.bf16.mxu0 0
        %1235 = vmatpush1.bf16.msra.mxu0 0
        %1236 = vmatprep.subr.bf16.mxu0 0
        %1237 = vmatpush1.bf16.msra.mxu0 0
        %1238 = vmatprep.subr.bf16.mxu0 0
        %1239 = vmatpush1.bf16.msra.mxu0 0
        %1240 = vmatprep.subr.bf16.mxu0 0
        %1241 = vmatpush1.bf16.msra.mxu0 0
        %1242 = vmatprep.subr.bf16.mxu0 0
        %1243 = vmatpush1.bf16.msra.mxu0 0
        %1244 = vmatprep.subr.bf16.mxu0 0
        %1245 = vmatpush1.bf16.msra.mxu0 0
        %1246 = vmatprep.subr.bf16.mxu0 0
        %1247 = vmatpush1.bf16.msra.mxu0 0
        %1248 = vmatprep.subr.bf16.mxu0 0
        %1249 = vmatpush1.bf16.msra.mxu0 0
        %1250 = vmatprep.subr.bf16.mxu0 0
        %1251 = vmatpush1.bf16.msra.mxu0 0
        %1252 = vmatprep.mubr.bf16.mxu0 0
        %1253 = vmatmul.mubr.bf16.gmra.mrb[0].mxu0 %v1218
        %v1254 = vpop.f32.mrb[0].mxu0
        %v1255 = vadd.f32 0.0, %v1254
        %v1256 = vpop.f32.mrb[0].mxu0
        %v1257 = vpop.f32.mrb[0].mxu0
        %v1258 = vpop.f32.mrb[0].mxu0
        %1259 = vdwg.mxu0
        %v1260 = vadd.f32 %v1212, %v1255
        %1262 = vrot.lane.b32.xlu0 %v1216, 127
        %v1263 = vpop.permute.xlu0 %1262
        %v1266 = vsel %vm936, %v343, 0
        %1268 = vmatprep.subr.bf16.mxu0 0
        %1269 = vmatpush1.bf16.msra.mxu0 %v1263
        %1270 = vmatprep.subr.bf16.mxu0 0
        %1271 = vmatpush1.bf16.msra.mxu0 0
        %1272 = vmatprep.subr.bf16.mxu0 0
        %1273 = vmatpush1.bf16.msra.mxu0 0
        %1274 = vmatprep.subr.bf16.mxu0 0
        %1275 = vmatpush1.bf16.msra.mxu0 0
        %1276 = vmatprep.subr.bf16.mxu0 0
        %1277 = vmatpush1.bf16.msra.mxu0 0
        %1278 = vmatprep.subr.bf16.mxu0 0
        %1279 = vmatpush1.bf16.msra.mxu0 0
        %1280 = vmatprep.subr.bf16.mxu0 0
        %1281 = vmatpush1.bf16.msra.mxu0 0
        %1282 = vmatprep.subr.bf16.mxu0 0
        %1283 = vmatpush1.bf16.msra.mxu0 0
        %1284 = vmatprep.subr.bf16.mxu0 0
        %1285 = vmatpush1.bf16.msra.mxu0 0
        %1286 = vmatprep.subr.bf16.mxu0 0
        %1287 = vmatpush1.bf16.msra.mxu0 0
        %1288 = vmatprep.subr.bf16.mxu0 0
        %1289 = vmatpush1.bf16.msra.mxu0 0
        %1290 = vmatprep.subr.bf16.mxu0 0
        %1291 = vmatpush1.bf16.msra.mxu0 0
        %1292 = vmatprep.subr.bf16.mxu0 0
        %1293 = vmatpush1.bf16.msra.mxu0 0
        %1294 = vmatprep.subr.bf16.mxu0 0
        %1295 = vmatpush1.bf16.msra.mxu0 0
        %1296 = vmatprep.subr.bf16.mxu0 0
        %1297 = vmatpush1.bf16.msra.mxu0 0
        %1298 = vmatprep.subr.bf16.mxu0 0
        %1299 = vmatpush1.bf16.msra.mxu0 0
        %1300 = vmatprep.mubr.bf16.mxu0 0
        %1301 = vmatmul.mubr.bf16.gmra.mrb[0].mxu0 %v1266
        %v1302 = vpop.f32.mrb[0].mxu0
        %v1303 = vadd.f32 0.0, %v1302
        %v1304 = vpop.f32.mrb[0].mxu0
        %v1305 = vpop.f32.mrb[0].mxu0
        %v1306 = vpop.f32.mrb[0].mxu0
        %1307 = vdwg.mxu0
        %v1308 = vadd.f32 %v1260, %v1303
        %1309 = vrot.lane.b32.xlu0 %v1216, 126
        %v1310 = vpop.permute.xlu0 %1309
        %v1313 = vsel %vm936, %v345, 0
        %1315 = vmatprep.subr.bf16.mxu0 0
        %1316 = vmatpush1.bf16.msra.mxu0 %v1310
        %1317 = vmatprep.subr.bf16.mxu0 0
        %1318 = vmatpush1.bf16.msra.mxu0 0
        %1319 = vmatprep.subr.bf16.mxu0 0
        %1320 = vmatpush1.bf16.msra.mxu0 0
        %1321 = vmatprep.subr.bf16.mxu0 0
        %1322 = vmatpush1.bf16.msra.mxu0 0
        %1323 = vmatprep.subr.bf16.mxu0 0
        %1324 = vmatpush1.bf16.msra.mxu0 0
        %1325 = vmatprep.subr.bf16.mxu0 0
        %1326 = vmatpush1.bf16.msra.mxu0 0
        %1327 = vmatprep.subr.bf16.mxu0 0
        %1328 = vmatpush1.bf16.msra.mxu0 0
        %1329 = vmatprep.subr.bf16.mxu0 0
        %1330 = vmatpush1.bf16.msra.mxu0 0
        %1331 = vmatprep.subr.bf16.mxu0 0
        %1332 = vmatpush1.bf16.msra.mxu0 0
        %1333 = vmatprep.subr.bf16.mxu0 0
        %1334 = vmatpush1.bf16.msra.mxu0 0
        %1335 = vmatprep.subr.bf16.mxu0 0
        %1336 = vmatpush1.bf16.msra.mxu0 0
        %1337 = vmatprep.subr.bf16.mxu0 0
        %1338 = vmatpush1.bf16.msra.mxu0 0
        %1339 = vmatprep.subr.bf16.mxu0 0
        %1340 = vmatpush1.bf16.msra.mxu0 0
        %1341 = vmatprep.subr.bf16.mxu0 0
        %1342 = vmatpush1.bf16.msra.mxu0 0
        %1343 = vmatprep.subr.bf16.mxu0 0
        %1344 = vmatpush1.bf16.msra.mxu0 0
        %1345 = vmatprep.subr.bf16.mxu0 0
        %1346 = vmatpush1.bf16.msra.mxu0 0
        %1347 = vmatprep.mubr.bf16.mxu0 0
        %1348 = vmatmul.mubr.bf16.gmra.mrb[0].mxu0 %v1313
        %v1349 = vpop.f32.mrb[0].mxu0
        %v1350 = vadd.f32 0.0, %v1349
        %v1351 = vpop.f32.mrb[0].mxu0
        %v1352 = vpop.f32.mrb[0].mxu0
        %v1353 = vpop.f32.mrb[0].mxu0
        %1354 = vdwg.mxu0
        %v1355 = vadd.f32 %v1308, %v1350
        %1357 = vset.pattern.permute.xlu0 0
        %1358 = vperm.xlu0 %1357, %v348
        %v1359 = vpop.permute.xlu0 %1358
        %v1361 = vadd.f32 %v1355, %v1359
        %v1362 = vmax.f32 %v1361, 0.0
        %1364 = vset.pattern.permute.xlu0 0
        %1365 = vperm.xlu0 %1364, %v349
        %v1366 = vpop.permute.xlu0 %1365
        %v1368 = vmul.f32 %v1362, %v1366
        %v1369 = vsel %vm936, %v1368, 0.0
        %v1370 = vrot.slane %v1369, 4
        %v1371 = vadd.f32 %v1369, %v1370
        %v1372 = vrot.slane %v1371, 2
        %v1373 = vadd.f32 %v1371, %v1372
        %v1374 = vrot.slane %v1373, 1
        %v1375 = vadd.f32 %v1373, %v1374
        %1377 = vset.pattern.permute.xlu0 0
        %1378 = vperm.xlu0 %1377, %v350
        %v1379 = vpop.permute.xlu0 %1378
        %v1381 = vlaneseq
        %v1382 = vshrl.u32 %v1381, 7
        %v1383 = vsub.s32 0, %v1382
        %v1384 = vrot.slane %v1379, %v1383
        %v1385 = vadd.f32 %v1375, %v1384
        %s1386 = scalar_lea.vmem %s300, %s924
        %vm1387 = vcmask 122880
        %1388 = vst.msk [vmem:[%s1386] sm:$0x1] %vm1387, %v1385
      $region60: #{_lambda_.2} parent=47 // loop_footer
        %s928 = sadd.s32 1, %s924
      $region61: #{_lambda_.2} parent=47 // loop_footer_branch
        %923 = sbr.rel target = $region57
      $region62: #{_lambda_.2} parent=47 // loop_exit
        _
      %p1389 = scmp.lt.s32.totalorder %s24, 1
      %s1390 = scalar_select %p1389, %s24, 1
      %p1391 = scmp.lt.s32.totalorder %s25, 1
      %s1392 = scalar_select %p1391, %s25, 1
      %s1393 = smul.addr %s1390, 2
      %s1394 = sadd.s32 %s1392, %s1393
      %s1395 = smul.addr %s1394, 8
      %s1396 = scalar_lea.vmem %s7, %s1395
      // Predicated region
      $region63: #{_lambda_.2} parent=47 // pred_check
        %p1397 = pneg %p204
      $region64: #{_lambda_.2} parent=47 // pred_check_branch
        %1399 = sbr.rel (%p1397) target = $region66
      $region65: #{_lambda_.2} parent=47 // pred_region
        _
      $region66: #{_lambda_.2} parent=47 // pred_fallthru
        _
    $region48: #{_lambda_.2} parent=5 // pred_fallthru
      _
    %p1400 = scmp.le.s32.totalorder 2, %s15
    // Predicated region
    $region67: #{_lambda_.2} parent=5 // pred_check
      %p1401 = pneg %p1400
    $region68: #{_lambda_.2} parent=5 // pred_check_branch
      %1403 = sbr.rel (%p1401) target = $region70
    $region69: #{_lambda_.2} parent=5 // pred_region
      %s1404 = ssub.s32 %s15, 2
      // Predicated region
      $region71: #{_lambda_.2} parent=69 // pred_check
        %p1405 = pneg %p210
      $region72: #{_lambda_.2} parent=69 // pred_check_branch
        %1407 = sbr.rel (%p1405) target = $region74
      $region73: #{_lambda_.2} parent=69 // pred_region
        %p1408 = scmp.lt.s32.totalorder %s26, 1
        %s1409 = scalar_select %p1408, %s26, 1
        %p1410 = scmp.lt.s32.totalorder %s27, 1
        %s1411 = scalar_select %p1410, %s27, 1
        %s1412 = smul.addr %s1409, 2
        %s1413 = sadd.s32 %s1411, %s1412
        %s1414 = smul.addr %s1413, 8
        %s1415 = scalar_lea.vmem %s7, %s1414
      $region74: #{_lambda_.2} parent=69 // pred_fallthru
        _
    $region70: #{_lambda_.2} parent=5 // pred_fallthru
      _
  $region6: #{_lambda_.2} parent=0 // loop_footer
    %s19 = sadd.s32 1, %s15
  $region7: #{_lambda_.2} parent=0 // loop_footer_branch
    %14 = sbr.rel target = $region3
  $region8: #{_lambda_.2} parent=0 // loop_exit
    _

</llo_original>
